<compile_context>
chip_gen: v5e
topology: v5e:2x2
jax: 0.10.0
libtpu: 0.0.40
codegen_flags: <defaults>
</compile_context>

<pallas_src>
import functools

import jax
import jax.numpy as jnp
from jax.experimental import pallas as pl
from jax.experimental.pallas import tpu as pltpu


def _round_up(x, m):
    return ((x + m - 1) // m) * m


def _gru_encoder_chunk_kernel(seq_len,          # static: true sequence length
                              x_ref,            # (TB, H)  embedded tokens of chunk
                              h0_ref,           # (1, H)   initial hidden
                              wih_ref,          # (H, 3H)  W_ih^T
                              bih_ref,          # (1, 3H)  b_ih
                              whh_ref,          # (H, 3H)  W_hh^T
                              bhh_ref,          # (1, 3H)  b_hh
                              out_ref,          # (TB, H)  chunk outputs
                              h_scratch,        # (1, H)   carried hidden state
                              gi_scratch):      # (TB, 3H) chunk input projection
    c = pl.program_id(0)
    tb = x_ref.shape[0]
    H = h0_ref.shape[-1]

    @pl.when(c == 0)
    def _():
        h_scratch[...] = h0_ref[...]

    # Input projection for the whole chunk in one MXU matmul (M = TB),
    # amortized over the TB sequential steps below.
    gi_scratch[...] = (
        jnp.dot(x_ref[...], wih_ref[...], preferred_element_type=jnp.float32)
        + bih_ref[...])

    whh = whh_ref[...]            # (H, 3H) resident in vregs/VMEM
    bhh = bhh_ref[...]            # (1, 3H)
    base = c * tb

    def step(j, h):
        gi_j = gi_scratch[pl.ds(j, 1), :]                     # (1, 3H)
        # Single fused recurrent GEMV: one MXU push per token.
        gh = jnp.dot(h, whh, preferred_element_type=jnp.float32) + bhh
        r = jax.nn.sigmoid(gi_j[:, :H] + gh[:, :H])
        z = jax.nn.sigmoid(gi_j[:, H:2 * H] + gh[:, H:2 * H])
        n = jnp.tanh(gi_j[:, 2 * H:] + r * gh[:, 2 * H:])
        h_new = (1.0 - z) * n + z * h                          # f32 gating
        out_ref[pl.ds(j, 1), :] = h_new.astype(out_ref.dtype)
        # Padded steps (t >= seq_len) must not advance the hidden state.
        return jnp.where(base + j < seq_len, h_new, h)

    # h carried as a loop-carry value (stays in vregs across the chunk).
    h_final = jax.lax.fori_loop(0, tb, step, h_scratch[...], unroll=True)
    h_scratch[...] = h_final


def encoder_rnn_sequence(tokens, hidden0, params, tb=16):
    """Run the EncoderRNN over a token sequence with one pallas_call.

    tokens: (T,) int32.  hidden0: (1, 1, H) f32.
    Returns (outputs (T, 1, H), hidden (1, 1, H)) — identical to calling the
    PyTorch EncoderRNN.forward once per token and stacking the outputs.
    """
    emb = params["embedding"]
    V, H = emb.shape
    tokens = jnp.asarray(tokens, dtype=jnp.int32).reshape((-1,))
    T = int(tokens.shape[0])

    # Chunk size: multiple of 8 (sublane alignment), no larger than needed.
    tb = max(8, _round_up(min(tb, _round_up(T, 8)), 8))
    num_chunks = pl.cdiv(T, tb)
    T_pad = num_chunks * tb

    # Wrapper-side contiguous embedding gather (replaces T tiny (1, H) DMAs).
    x_all = jnp.take(emb, tokens, axis=0).astype(jnp.float32)      # (T, H)
    if T_pad > T:
        x_all = jnp.pad(x_all, ((0, T_pad - T), (0, 0)))

    h2d = hidden0.reshape(1, H).astype(jnp.float32)
    w_ih_t, b_ih = params["w_ih_t"], params["b_ih"]
    w_hh_t, b_hh = params["w_hh_t"], params["b_hh"]

    grid_spec = pltpu.PrefetchScalarGridSpec(
        num_scalar_prefetch=0,
        grid=(num_chunks,),
        in_specs=[
            pl.BlockSpec((tb, H), lambda c: (c, 0)),          # x chunk
            pl.BlockSpec((1, H), lambda c: (0, 0)),           # h0
            # Constant index maps -> one HBM->VMEM DMA per call, resident
            # for the whole sequence. (pipeline_mode=pl.Buffered(1) would
            # shave the double-buffer VMEM; negligible at H=128.)
            pl.BlockSpec((H, 3 * H), lambda c: (0, 0)),       # W_ih^T
            pl.BlockSpec((1, 3 * H), lambda c: (0, 0)),       # b_ih
            pl.BlockSpec((H, 3 * H), lambda c: (0, 0)),       # W_hh^T
            pl.BlockSpec((1, 3 * H), lambda c: (0, 0)),       # b_hh
        ],
        out_specs=pl.BlockSpec((tb, H), lambda c: (c, 0)),     # per-chunk writeback
        scratch_shapes=[
            pltpu.VMEM((1, H), jnp.float32),                   # carried hidden
            pltpu.VMEM((tb, 3 * H), jnp.float32),              # chunk gi
        ],
    )

    flops = 4 * T_pad * H * 3 * H                  # chunk projection + recurrence
    transcendentals = T_pad * 3 * H
    bytes_accessed = (
        T_pad * H * 4                              # x chunks
        + 2 * H * 3 * H * 4 + 2 * 3 * H * 4        # weights + biases
        + H * 4                                    # h0
        + T_pad * H * 4)                           # outputs

    outs = pl.pallas_call(
        functools.partial(_gru_encoder_chunk_kernel, T),
        out_shape=jax.ShapeDtypeStruct((T_pad, H), jnp.float32),
        grid_spec=grid_spec,
        compiler_params=pltpu.CompilerParams(
            dimension_semantics=("arbitrary",)),   # recurrence -> sequential grid
        cost_estimate=pl.CostEstimate(
            flops=flops, transcendentals=transcendentals,
            bytes_accessed=bytes_accessed),
    )(x_all, h2d, w_ih_t, b_ih, w_hh_t, b_hh)

    outputs = outs[:T].reshape(T, 1, H)
    hidden = outs[T - 1].reshape(1, 1, H)
    return outputs, hidden


def encoder_rnn_forward(token, hidden, params):
    """Single-step API matching EncoderRNN.forward(input, hidden)."""
    tok = jnp.asarray(token, dtype=jnp.int32).reshape((1,))
    outputs, hidden_new = encoder_rnn_sequence(tok, hidden, params)
    H = hidden.shape[-1]
    return outputs.reshape(1, 1, H), hidden_new


def init_torch_like_params(key, input_size, hidden_size):
    """Same shapes/init style as nn.Embedding(input_size, H) + nn.GRU(H, H)."""
    # TODO(synk): pretrained GloVe / Tencent embedding loading is file I/O in the
    # original script; a random embedding table stands in for it here.
    k_emb, k_wih, k_whh, k_bih, k_bhh = jax.random.split(key, 5)
    H = hidden_size
    scale = 1.0 / jnp.sqrt(jnp.float32(H))
    return {
        "embedding": jax.random.normal(k_emb, (input_size, H), jnp.float32),
        "w_ih": jax.random.uniform(k_wih, (3 * H, H), jnp.float32, -scale, scale),
        "w_hh": jax.random.uniform(k_whh, (3 * H, H), jnp.float32, -scale, scale),
        "b_ih": jax.random.uniform(k_bih, (3 * H,), jnp.float32, -scale, scale),
        "b_hh": jax.random.uniform(k_bhh, (3 * H,), jnp.float32, -scale, scale),
    }


def prepare_kernel_params(raw):
    """Restructure PyTorch-layout GRU weights for the kernel (all f32)."""
    H = raw["w_ih"].shape[1]
    return {
        "embedding": raw["embedding"].astype(jnp.float32),
        "w_ih_t": raw["w_ih"].T.astype(jnp.float32),              # (H, 3H)
        "b_ih": raw["b_ih"].reshape(1, 3 * H).astype(jnp.float32),
        "w_hh_t": raw["w_hh"].T.astype(jnp.float32),              # (H, 3H)
        "b_hh": raw["b_hh"].reshape(1, 3 * H).astype(jnp.float32),
    }


def _reference_sequence_f32(tokens, hidden0, raw):
    """Pure-f32 PyTorch GRU math (nn.GRU gate order [r, z, n])."""
    H = hidden0.shape[-1]
    emb, w_ih, w_hh = raw["embedding"], raw["w_ih"], raw["w_hh"]
    b_ih, b_hh = raw["b_ih"], raw["b_hh"]
    h = hidden0.reshape(1, H)
    outs = []
    for t in range(tokens.shape[0]):
        x = emb[tokens[t]].reshape(1, H)
        gi = x @ w_ih.T + b_ih
        gh = h @ w_hh.T + b_hh
        r = jax.nn.sigmoid(gi[:, :H] + gh[:, :H])
        z = jax.nn.sigmoid(gi[:, H:2 * H] + gh[:, H:2 * H])
        n = jnp.tanh(gi[:, 2 * H:] + r * gh[:, 2 * H:])
        h = (1.0 - z) * n + z * h
        outs.append(h)
    return jnp.stack(outs).reshape(-1, 1, H), h.reshape(1, 1, H)


if __name__ == "__main__":
    VOCAB = 16          # vocab size
    HIDDEN = 128        # hidden_size (lane-aligned; == embedding dim as in GRU(H, H))
    SEQ = 13            # token-sequence length (exercises chunking + tail padding)
    TB = 8              # tokens per grid step

    key = jax.random.PRNGKey(0)
    raw = init_torch_like_params(key, VOCAB, HIDDEN)
    params = prepare_kernel_params(raw)

    tokens = jax.random.randint(jax.random.PRNGKey(1), (SEQ,), 0, VOCAB,
                                dtype=jnp.int32)
    hidden0 = jnp.zeros((1, 1, HIDDEN), dtype=jnp.float32)  # EncoderRNN.initHidden()

    # Full-sequence encoder: weights resident, hidden carried across chunks.
    outputs, hidden_final = encoder_rnn_sequence(tokens, hidden0, params, tb=TB)
    jax.block_until_ready((outputs, hidden_final))

    # Single-step API identical to EncoderRNN.forward.
    out1, h1 = encoder_rnn_forward(tokens[0], hidden0, params)
    jax.block_until_ready((out1, h1))

    assert outputs.shape == (SEQ, 1, HIDDEN)
    assert hidden_final.shape == (1, 1, HIDDEN)

    ref_outs, ref_h = _reference_sequence_f32(tokens, hidden0, raw)
    assert jnp.allclose(outputs, ref_outs, atol=1e-2), "mismatch vs f32 reference"
    assert jnp.allclose(hidden_final, ref_h, atol=1e-2), "mismatch vs f32 reference"
    assert jnp.allclose(out1, ref_outs[0:1], atol=1e-2)
    assert jnp.allclose(h1, ref_outs[0].reshape(1, 1, HIDDEN), atol=1e-2)

    print("KERNEL_OK")
</pallas_src>

<mosaic_0001>
module attributes {stable_mosaic.version = 11 : i64} {
  func.func @_gru_encoder_chunk_kernel(%arg0: i32, %arg1: memref<8x128xf32, #tpu.memory_space<vmem>>, %arg2: memref<1x128xf32, #tpu.memory_space<vmem>>, %arg3: memref<128x384xf32, #tpu.memory_space<vmem>>, %arg4: memref<1x384xf32, #tpu.memory_space<vmem>>, %arg5: memref<128x384xf32, #tpu.memory_space<vmem>>, %arg6: memref<1x384xf32, #tpu.memory_space<vmem>>, %arg7: memref<8x128xf32, #tpu.memory_space<vmem>>, %arg8: memref<1x128xf32, #tpu.memory_space<vmem>>, %arg9: memref<8x384xf32, #tpu.memory_space<vmem>>) attributes {dimension_semantics = [#tpu.dimension_semantics<arbitrary>], iteration_bounds = array<i64: 2>, scalar_prefetch = 0 : i64, scratch_operands = 2 : i64, tpu.core_type = #tpu.core_type<tc>, window_params = [{transform_indices = @transform_0, window_bounds = array<i64: 8, 128>}, {pipeline_mode = #tpu.pipeline_mode<synchronous>, transform_indices = @transform_1, window_bounds = array<i64: 1, 128>}, {pipeline_mode = #tpu.pipeline_mode<synchronous>, transform_indices = @transform_2, window_bounds = array<i64: 128, 384>}, {pipeline_mode = #tpu.pipeline_mode<synchronous>, transform_indices = @transform_3, window_bounds = array<i64: 1, 384>}, {pipeline_mode = #tpu.pipeline_mode<synchronous>, transform_indices = @transform_4, window_bounds = array<i64: 128, 384>}, {pipeline_mode = #tpu.pipeline_mode<synchronous>, transform_indices = @transform_5, window_bounds = array<i64: 1, 384>}, {transform_indices = @transform_6, window_bounds = array<i64: 8, 128>}]} {
    %c0_i32 = arith.constant 0 : i32
    %0 = arith.cmpi eq, %arg0, %c0_i32 : i32
    %1 = arith.extui %0 : i1 to i32
    %c0_i32_0 = arith.constant 0 : i32
    %2 = arith.cmpi ne, %1, %c0_i32_0 : i32
    scf.if %2 {
      %c0_73 = arith.constant 0 : index
      %c0_74 = arith.constant 0 : index
      %295 = vector.load %arg2[%c0_73, %c0_74] : memref<1x128xf32, #tpu.memory_space<vmem>>, vector<1x128xf32>
      %c0_75 = arith.constant 0 : index
      %c0_76 = arith.constant 0 : index
      %296 = vector.load %arg8[%c0_75, %c0_76] : memref<1x128xf32, #tpu.memory_space<vmem>>, vector<1x128xf32>
      tpu.vector_store %arg8[%c0_75, %c0_76], %295 {strides = array<i32>} : memref<1x128xf32, #tpu.memory_space<vmem>>, vector<1x128xf32>,
    } else {
    }
    %c0 = arith.constant 0 : index
    %c0_1 = arith.constant 0 : index
    %3 = vector.load %arg1[%c0, %c0_1] : memref<8x128xf32, #tpu.memory_space<vmem>>, vector<8x128xf32>
    %c0_2 = arith.constant 0 : index
    %c0_3 = arith.constant 0 : index
    %4 = vector.load %arg3[%c0_2, %c0_3] : memref<128x384xf32, #tpu.memory_space<vmem>>, vector<128x384xf32>
    %cst = arith.constant dense<0.000000e+00> : vector<8x384xf32>
    %5 = tpu.matmul %3, %4, %cst {dimension_numbers = #tpu.dot_dimension_numbers<[1], [0], [0], [1], [0, 0, 1, 1], [], []>} : vector<8x128xf32>, vector<128x384xf32>, vector<8x384xf32> -> vector<8x384xf32>
    %c0_4 = arith.constant 0 : index
    %c0_5 = arith.constant 0 : index
    %6 = vector.load %arg4[%c0_4, %c0_5] : memref<1x384xf32, #tpu.memory_space<vmem>>, vector<1x384xf32>
    %7 = vector.broadcast %6 : vector<1x384xf32> to vector<8x384xf32>
    %8 = arith.addf %5, %7 : vector<8x384xf32>
    %c0_6 = arith.constant 0 : index
    %c0_7 = arith.constant 0 : index
    %9 = vector.load %arg9[%c0_6, %c0_7] : memref<8x384xf32, #tpu.memory_space<vmem>>, vector<8x384xf32>
    tpu.vector_store %arg9[%c0_6, %c0_7], %8 {strides = array<i32>} : memref<8x384xf32, #tpu.memory_space<vmem>>, vector<8x384xf32>,
    %c0_8 = arith.constant 0 : index
    %c0_9 = arith.constant 0 : index
    %10 = vector.load %arg5[%c0_8, %c0_9] : memref<128x384xf32, #tpu.memory_space<vmem>>, vector<128x384xf32>
    %c0_10 = arith.constant 0 : index
    %c0_11 = arith.constant 0 : index
    %11 = vector.load %arg6[%c0_10, %c0_11] : memref<1x384xf32, #tpu.memory_space<vmem>>, vector<1x384xf32>
    %c8_i32 = arith.constant 8 : i32
    %12 = arith.muli %arg0, %c8_i32 : i32
    %c0_12 = arith.constant 0 : index
    %c0_13 = arith.constant 0 : index
    %13 = vector.load %arg8[%c0_12, %c0_13] : memref<1x128xf32, #tpu.memory_space<vmem>>, vector<1x128xf32>
    %c0_i32_14 = arith.constant 0 : i32
    %14 = arith.index_cast %c0_i32_14 : i32 to index
    %c0_15 = arith.constant 0 : index
    %15 = vector.load %arg9[%14, %c0_15] : memref<8x384xf32, #tpu.memory_space<vmem>>, vector<1x384xf32>
    %cst_16 = arith.constant dense<0.000000e+00> : vector<1x384xf32>
    %16 = tpu.matmul %13, %10, %cst_16 {dimension_numbers = #tpu.dot_dimension_numbers<[1], [0], [0], [1], [0, 0, 1, 1], [], []>} : vector<1x128xf32>, vector<128x384xf32>, vector<1x384xf32> -> vector<1x384xf32>
    %17 = arith.addf %16, %11 : vector<1x384xf32>
    %18 = vector.extract_strided_slice %15 {offsets = [0, 0], sizes = [1, 128], strides = [1, 1]} : vector<1x384xf32> to vector<1x128xf32>
    %19 = vector.extract_strided_slice %17 {offsets = [0, 0], sizes = [1, 128], strides = [1, 1]} : vector<1x384xf32> to vector<1x128xf32>
    %20 = arith.addf %18, %19 : vector<1x128xf32>
    %21 = arith.negf %20 : vector<1x128xf32>
    %22 = math.exp %21 : vector<1x128xf32>
    %cst_17 = arith.constant 1.000000e+00 : f32
    %23 = vector.broadcast %cst_17 : f32 to vector<1x128xf32>
    %24 = arith.addf %23, %22 : vector<1x128xf32>
    %25 = arith.divf %23, %24 : vector<1x128xf32>
    %26 = vector.extract_strided_slice %15 {offsets = [0, 128], sizes = [1, 128], strides = [1, 1]} : vector<1x384xf32> to vector<1x128xf32>
    %27 = vector.extract_strided_slice %17 {offsets = [0, 128], sizes = [1, 128], strides = [1, 1]} : vector<1x384xf32> to vector<1x128xf32>
    %28 = arith.addf %26, %27 : vector<1x128xf32>
    %29 = arith.negf %28 : vector<1x128xf32>
    %30 = math.exp %29 : vector<1x128xf32>
    %cst_18 = arith.constant 1.000000e+00 : f32
    %31 = vector.broadcast %cst_18 : f32 to vector<1x128xf32>
    %32 = arith.addf %31, %30 : vector<1x128xf32>
    %33 = arith.divf %31, %32 : vector<1x128xf32>
    %34 = vector.extract_strided_slice %15 {offsets = [0, 256], sizes = [1, 128], strides = [1, 1]} : vector<1x384xf32> to vector<1x128xf32>
    %35 = vector.extract_strided_slice %17 {offsets = [0, 256], sizes = [1, 128], strides = [1, 1]} : vector<1x384xf32> to vector<1x128xf32>
    %36 = arith.mulf %25, %35 : vector<1x128xf32>
    %37 = arith.addf %34, %36 : vector<1x128xf32>
    %38 = math.tanh %37 : vector<1x128xf32>
    %cst_19 = arith.constant 1.000000e+00 : f32
    %39 = vector.broadcast %cst_19 : f32 to vector<1x128xf32>
    %40 = arith.subf %39, %33 : vector<1x128xf32>
    %41 = arith.mulf %40, %38 : vector<1x128xf32>
    %42 = arith.mulf %33, %13 : vector<1x128xf32>
    %43 = arith.addf %41, %42 : vector<1x128xf32>
    %44 = arith.index_cast %c0_i32_14 : i32 to index
    %c0_20 = arith.constant 0 : index
    %45 = vector.load %arg7[%44, %c0_20] : memref<8x128xf32, #tpu.memory_space<vmem>>, vector<1x128xf32>
    tpu.vector_store %arg7[%44, %c0_20], %43 {strides = array<i32>} : memref<8x128xf32, #tpu.memory_space<vmem>>, vector<1x128xf32>,
    %46 = arith.addi %12, %c0_i32_14 : i32
    %c13_i32 = arith.constant 13 : i32
    %47 = arith.cmpi slt, %46, %c13_i32 : i32
    %48 = arith.select %47, %43, %13 : vector<1x128xf32>
    %c1_i32 = arith.constant 1 : i32
    %49 = arith.index_cast %c1_i32 : i32 to index
    %c0_21 = arith.constant 0 : index
    %50 = vector.load %arg9[%49, %c0_21] : memref<8x384xf32, #tpu.memory_space<vmem>>, vector<1x384xf32>
    %cst_22 = arith.constant dense<0.000000e+00> : vector<1x384xf32>
    %51 = tpu.matmul %48, %10, %cst_22 {dimension_numbers = #tpu.dot_dimension_numbers<[1], [0], [0], [1], [0, 0, 1, 1], [], []>} : vector<1x128xf32>, vector<128x384xf32>, vector<1x384xf32> -> vector<1x384xf32>
    %52 = arith.addf %51, %11 : vector<1x384xf32>
    %53 = vector.extract_strided_slice %50 {offsets = [0, 0], sizes = [1, 128], strides = [1, 1]} : vector<1x384xf32> to vector<1x128xf32>
    %54 = vector.extract_strided_slice %52 {offsets = [0, 0], sizes = [1, 128], strides = [1, 1]} : vector<1x384xf32> to vector<1x128xf32>
    %55 = arith.addf %53, %54 : vector<1x128xf32>
    %56 = arith.negf %55 : vector<1x128xf32>
    %57 = math.exp %56 : vector<1x128xf32>
    %cst_23 = arith.constant 1.000000e+00 : f32
    %58 = vector.broadcast %cst_23 : f32 to vector<1x128xf32>
    %59 = arith.addf %58, %57 : vector<1x128xf32>
    %60 = arith.divf %58, %59 : vector<1x128xf32>
    %61 = vector.extract_strided_slice %50 {offsets = [0, 128], sizes = [1, 128], strides = [1, 1]} : vector<1x384xf32> to vector<1x128xf32>
    %62 = vector.extract_strided_slice %52 {offsets = [0, 128], sizes = [1, 128], strides = [1, 1]} : vector<1x384xf32> to vector<1x128xf32>
    %63 = arith.addf %61, %62 : vector<1x128xf32>
    %64 = arith.negf %63 : vector<1x128xf32>
    %65 = math.exp %64 : vector<1x128xf32>
    %cst_24 = arith.constant 1.000000e+00 : f32
    %66 = vector.broadcast %cst_24 : f32 to vector<1x128xf32>
    %67 = arith.addf %66, %65 : vector<1x128xf32>
    %68 = arith.divf %66, %67 : vector<1x128xf32>
    %69 = vector.extract_strided_slice %50 {offsets = [0, 256], sizes = [1, 128], strides = [1, 1]} : vector<1x384xf32> to vector<1x128xf32>
    %70 = vector.extract_strided_slice %52 {offsets = [0, 256], sizes = [1, 128], strides = [1, 1]} : vector<1x384xf32> to vector<1x128xf32>
    %71 = arith.mulf %60, %70 : vector<1x128xf32>
    %72 = arith.addf %69, %71 : vector<1x128xf32>
    %73 = math.tanh %72 : vector<1x128xf32>
    %cst_25 = arith.constant 1.000000e+00 : f32
    %74 = vector.broadcast %cst_25 : f32 to vector<1x128xf32>
    %75 = arith.subf %74, %68 : vector<1x128xf32>
    %76 = arith.mulf %75, %73 : vector<1x128xf32>
    %77 = arith.mulf %68, %48 : vector<1x128xf32>
    %78 = arith.addf %76, %77 : vector<1x128xf32>
    %79 = arith.index_cast %c1_i32 : i32 to index
    %c0_26 = arith.constant 0 : index
    %80 = vector.load %arg7[%79, %c0_26] : memref<8x128xf32, #tpu.memory_space<vmem>>, vector<1x128xf32>
    tpu.vector_store %arg7[%79, %c0_26], %78 {strides = array<i32>} : memref<8x128xf32, #tpu.memory_space<vmem>>, vector<1x128xf32>,
    %81 = arith.addi %12, %c1_i32 : i32
    %c13_i32_27 = arith.constant 13 : i32
    %82 = arith.cmpi slt, %81, %c13_i32_27 : i32
    %83 = arith.select %82, %78, %48 : vector<1x128xf32>
    %c2_i32 = arith.constant 2 : i32
    %84 = arith.index_cast %c2_i32 : i32 to index
    %c0_28 = arith.constant 0 : index
    %85 = vector.load %arg9[%84, %c0_28] : memref<8x384xf32, #tpu.memory_space<vmem>>, vector<1x384xf32>
    %cst_29 = arith.constant dense<0.000000e+00> : vector<1x384xf32>
    %86 = tpu.matmul %83, %10, %cst_29 {dimension_numbers = #tpu.dot_dimension_numbers<[1], [0], [0], [1], [0, 0, 1, 1], [], []>} : vector<1x128xf32>, vector<128x384xf32>, vector<1x384xf32> -> vector<1x384xf32>
    %87 = arith.addf %86, %11 : vector<1x384xf32>
    %88 = vector.extract_strided_slice %85 {offsets = [0, 0], sizes = [1, 128], strides = [1, 1]} : vector<1x384xf32> to vector<1x128xf32>
    %89 = vector.extract_strided_slice %87 {offsets = [0, 0], sizes = [1, 128], strides = [1, 1]} : vector<1x384xf32> to vector<1x128xf32>
    %90 = arith.addf %88, %89 : vector<1x128xf32>
    %91 = arith.negf %90 : vector<1x128xf32>
    %92 = math.exp %91 : vector<1x128xf32>
    %cst_30 = arith.constant 1.000000e+00 : f32
    %93 = vector.broadcast %cst_30 : f32 to vector<1x128xf32>
    %94 = arith.addf %93, %92 : vector<1x128xf32>
    %95 = arith.divf %93, %94 : vector<1x128xf32>
    %96 = vector.extract_strided_slice %85 {offsets = [0, 128], sizes = [1, 128], strides = [1, 1]} : vector<1x384xf32> to vector<1x128xf32>
    %97 = vector.extract_strided_slice %87 {offsets = [0, 128], sizes = [1, 128], strides = [1, 1]} : vector<1x384xf32> to vector<1x128xf32>
    %98 = arith.addf %96, %97 : vector<1x128xf32>
    %99 = arith.negf %98 : vector<1x128xf32>
    %100 = math.exp %99 : vector<1x128xf32>
    %cst_31 = arith.constant 1.000000e+00 : f32
    %101 = vector.broadcast %cst_31 : f32 to vector<1x128xf32>
    %102 = arith.addf %101, %100 : vector<1x128xf32>
    %103 = arith.divf %101, %102 : vector<1x128xf32>
    %104 = vector.extract_strided_slice %85 {offsets = [0, 256], sizes = [1, 128], strides = [1, 1]} : vector<1x384xf32> to vector<1x128xf32>
    %105 = vector.extract_strided_slice %87 {offsets = [0, 256], sizes = [1, 128], strides = [1, 1]} : vector<1x384xf32> to vector<1x128xf32>
    %106 = arith.mulf %95, %105 : vector<1x128xf32>
    %107 = arith.addf %104, %106 : vector<1x128xf32>
    %108 = math.tanh %107 : vector<1x128xf32>
    %cst_32 = arith.constant 1.000000e+00 : f32
    %109 = vector.broadcast %cst_32 : f32 to vector<1x128xf32>
    %110 = arith.subf %109, %103 : vector<1x128xf32>
    %111 = arith.mulf %110, %108 : vector<1x128xf32>
    %112 = arith.mulf %103, %83 : vector<1x128xf32>
    %113 = arith.addf %111, %112 : vector<1x128xf32>
    %114 = arith.index_cast %c2_i32 : i32 to index
    %c0_33 = arith.constant 0 : index
    %115 = vector.load %arg7[%114, %c0_33] : memref<8x128xf32, #tpu.memory_space<vmem>>, vector<1x128xf32>
    tpu.vector_store %arg7[%114, %c0_33], %113 {strides = array<i32>} : memref<8x128xf32, #tpu.memory_space<vmem>>, vector<1x128xf32>,
    %116 = arith.addi %12, %c2_i32 : i32
    %c13_i32_34 = arith.constant 13 : i32
    %117 = arith.cmpi slt, %116, %c13_i32_34 : i32
    %118 = arith.select %117, %113, %83 : vector<1x128xf32>
    %c3_i32 = arith.constant 3 : i32
    %119 = arith.index_cast %c3_i32 : i32 to index
    %c0_35 = arith.constant 0 : index
    %120 = vector.load %arg9[%119, %c0_35] : memref<8x384xf32, #tpu.memory_space<vmem>>, vector<1x384xf32>
    %cst_36 = arith.constant dense<0.000000e+00> : vector<1x384xf32>
    %121 = tpu.matmul %118, %10, %cst_36 {dimension_numbers = #tpu.dot_dimension_numbers<[1], [0], [0], [1], [0, 0, 1, 1], [], []>} : vector<1x128xf32>, vector<128x384xf32>, vector<1x384xf32> -> vector<1x384xf32>
    %122 = arith.addf %121, %11 : vector<1x384xf32>
    %123 = vector.extract_strided_slice %120 {offsets = [0, 0], sizes = [1, 128], strides = [1, 1]} : vector<1x384xf32> to vector<1x128xf32>
    %124 = vector.extract_strided_slice %122 {offsets = [0, 0], sizes = [1, 128], strides = [1, 1]} : vector<1x384xf32> to vector<1x128xf32>
    %125 = arith.addf %123, %124 : vector<1x128xf32>
    %126 = arith.negf %125 : vector<1x128xf32>
    %127 = math.exp %126 : vector<1x128xf32>
    %cst_37 = arith.constant 1.000000e+00 : f32
    %128 = vector.broadcast %cst_37 : f32 to vector<1x128xf32>
    %129 = arith.addf %128, %127 : vector<1x128xf32>
    %130 = arith.divf %128, %129 : vector<1x128xf32>
    %131 = vector.extract_strided_slice %120 {offsets = [0, 128], sizes = [1, 128], strides = [1, 1]} : vector<1x384xf32> to vector<1x128xf32>
    %132 = vector.extract_strided_slice %122 {offsets = [0, 128], sizes = [1, 128], strides = [1, 1]} : vector<1x384xf32> to vector<1x128xf32>
    %133 = arith.addf %131, %132 : vector<1x128xf32>
    %134 = arith.negf %133 : vector<1x128xf32>
    %135 = math.exp %134 : vector<1x128xf32>
    %cst_38 = arith.constant 1.000000e+00 : f32
    %136 = vector.broadcast %cst_38 : f32 to vector<1x128xf32>
    %137 = arith.addf %136, %135 : vector<1x128xf32>
    %138 = arith.divf %136, %137 : vector<1x128xf32>
    %139 = vector.extract_strided_slice %120 {offsets = [0, 256], sizes = [1, 128], strides = [1, 1]} : vector<1x384xf32> to vector<1x128xf32>
    %140 = vector.extract_strided_slice %122 {offsets = [0, 256], sizes = [1, 128], strides = [1, 1]} : vector<1x384xf32> to vector<1x128xf32>
    %141 = arith.mulf %130, %140 : vector<1x128xf32>
    %142 = arith.addf %139, %141 : vector<1x128xf32>
    %143 = math.tanh %142 : vector<1x128xf32>
    %cst_39 = arith.constant 1.000000e+00 : f32
    %144 = vector.broadcast %cst_39 : f32 to vector<1x128xf32>
    %145 = arith.subf %144, %138 : vector<1x128xf32>
    %146 = arith.mulf %145, %143 : vector<1x128xf32>
    %147 = arith.mulf %138, %118 : vector<1x128xf32>
    %148 = arith.addf %146, %147 : vector<1x128xf32>
    %149 = arith.index_cast %c3_i32 : i32 to index
    %c0_40 = arith.constant 0 : index
    %150 = vector.load %arg7[%149, %c0_40] : memref<8x128xf32, #tpu.memory_space<vmem>>, vector<1x128xf32>
    tpu.vector_store %arg7[%149, %c0_40], %148 {strides = array<i32>} : memref<8x128xf32, #tpu.memory_space<vmem>>, vector<1x128xf32>,
    %151 = arith.addi %12, %c3_i32 : i32
    %c13_i32_41 = arith.constant 13 : i32
    %152 = arith.cmpi slt, %151, %c13_i32_41 : i32
    %153 = arith.select %152, %148, %118 : vector<1x128xf32>
    %c4_i32 = arith.constant 4 : i32
    %154 = arith.index_cast %c4_i32 : i32 to index
    %c0_42 = arith.constant 0 : index
    %155 = vector.load %arg9[%154, %c0_42] : memref<8x384xf32, #tpu.memory_space<vmem>>, vector<1x384xf32>
    %cst_43 = arith.constant dense<0.000000e+00> : vector<1x384xf32>
    %156 = tpu.matmul %153, %10, %cst_43 {dimension_numbers = #tpu.dot_dimension_numbers<[1], [0], [0], [1], [0, 0, 1, 1], [], []>} : vector<1x128xf32>, vector<128x384xf32>, vector<1x384xf32> -> vector<1x384xf32>
    %157 = arith.addf %156, %11 : vector<1x384xf32>
    %158 = vector.extract_strided_slice %155 {offsets = [0, 0], sizes = [1, 128], strides = [1, 1]} : vector<1x384xf32> to vector<1x128xf32>
    %159 = vector.extract_strided_slice %157 {offsets = [0, 0], sizes = [1, 128], strides = [1, 1]} : vector<1x384xf32> to vector<1x128xf32>
    %160 = arith.addf %158, %159 : vector<1x128xf32>
    %161 = arith.negf %160 : vector<1x128xf32>
    %162 = math.exp %161 : vector<1x128xf32>
    %cst_44 = arith.constant 1.000000e+00 : f32
    %163 = vector.broadcast %cst_44 : f32 to vector<1x128xf32>
    %164 = arith.addf %163, %162 : vector<1x128xf32>
    %165 = arith.divf %163, %164 : vector<1x128xf32>
    %166 = vector.extract_strided_slice %155 {offsets = [0, 128], sizes = [1, 128], strides = [1, 1]} : vector<1x384xf32> to vector<1x128xf32>
    %167 = vector.extract_strided_slice %157 {offsets = [0, 128], sizes = [1, 128], strides = [1, 1]} : vector<1x384xf32> to vector<1x128xf32>
    %168 = arith.addf %166, %167 : vector<1x128xf32>
    %169 = arith.negf %168 : vector<1x128xf32>
    %170 = math.exp %169 : vector<1x128xf32>
    %cst_45 = arith.constant 1.000000e+00 : f32
    %171 = vector.broadcast %cst_45 : f32 to vector<1x128xf32>
    %172 = arith.addf %171, %170 : vector<1x128xf32>
    %173 = arith.divf %171, %172 : vector<1x128xf32>
    %174 = vector.extract_strided_slice %155 {offsets = [0, 256], sizes = [1, 128], strides = [1, 1]} : vector<1x384xf32> to vector<1x128xf32>
    %175 = vector.extract_strided_slice %157 {offsets = [0, 256], sizes = [1, 128], strides = [1, 1]} : vector<1x384xf32> to vector<1x128xf32>
    %176 = arith.mulf %165, %175 : vector<1x128xf32>
    %177 = arith.addf %174, %176 : vector<1x128xf32>
    %178 = math.tanh %177 : vector<1x128xf32>
    %cst_46 = arith.constant 1.000000e+00 : f32
    %179 = vector.broadcast %cst_46 : f32 to vector<1x128xf32>
    %180 = arith.subf %179, %173 : vector<1x128xf32>
    %181 = arith.mulf %180, %178 : vector<1x128xf32>
    %182 = arith.mulf %173, %153 : vector<1x128xf32>
    %183 = arith.addf %181, %182 : vector<1x128xf32>
    %184 = arith.index_cast %c4_i32 : i32 to index
    %c0_47 = arith.constant 0 : index
    %185 = vector.load %arg7[%184, %c0_47] : memref<8x128xf32, #tpu.memory_space<vmem>>, vector<1x128xf32>
    tpu.vector_store %arg7[%184, %c0_47], %183 {strides = array<i32>} : memref<8x128xf32, #tpu.memory_space<vmem>>, vector<1x128xf32>,
    %186 = arith.addi %12, %c4_i32 : i32
    %c13_i32_48 = arith.constant 13 : i32
    %187 = arith.cmpi slt, %186, %c13_i32_48 : i32
    %188 = arith.select %187, %183, %153 : vector<1x128xf32>
    %c5_i32 = arith.constant 5 : i32
    %189 = arith.index_cast %c5_i32 : i32 to index
    %c0_49 = arith.constant 0 : index
    %190 = vector.load %arg9[%189, %c0_49] : memref<8x384xf32, #tpu.memory_space<vmem>>, vector<1x384xf32>
    %cst_50 = arith.constant dense<0.000000e+00> : vector<1x384xf32>
    %191 = tpu.matmul %188, %10, %cst_50 {dimension_numbers = #tpu.dot_dimension_numbers<[1], [0], [0], [1], [0, 0, 1, 1], [], []>} : vector<1x128xf32>, vector<128x384xf32>, vector<1x384xf32> -> vector<1x384xf32>
    %192 = arith.addf %191, %11 : vector<1x384xf32>
    %193 = vector.extract_strided_slice %190 {offsets = [0, 0], sizes = [1, 128], strides = [1, 1]} : vector<1x384xf32> to vector<1x128xf32>
    %194 = vector.extract_strided_slice %192 {offsets = [0, 0], sizes = [1, 128], strides = [1, 1]} : vector<1x384xf32> to vector<1x128xf32>
    %195 = arith.addf %193, %194 : vector<1x128xf32>
    %196 = arith.negf %195 : vector<1x128xf32>
    %197 = math.exp %196 : vector<1x128xf32>
    %cst_51 = arith.constant 1.000000e+00 : f32
    %198 = vector.broadcast %cst_51 : f32 to vector<1x128xf32>
    %199 = arith.addf %198, %197 : vector<1x128xf32>
    %200 = arith.divf %198, %199 : vector<1x128xf32>
    %201 = vector.extract_strided_slice %190 {offsets = [0, 128], sizes = [1, 128], strides = [1, 1]} : vector<1x384xf32> to vector<1x128xf32>
    %202 = vector.extract_strided_slice %192 {offsets = [0, 128], sizes = [1, 128], strides = [1, 1]} : vector<1x384xf32> to vector<1x128xf32>
    %203 = arith.addf %201, %202 : vector<1x128xf32>
    %204 = arith.negf %203 : vector<1x128xf32>
    %205 = math.exp %204 : vector<1x128xf32>
    %cst_52 = arith.constant 1.000000e+00 : f32
    %206 = vector.broadcast %cst_52 : f32 to vector<1x128xf32>
    %207 = arith.addf %206, %205 : vector<1x128xf32>
    %208 = arith.divf %206, %207 : vector<1x128xf32>
    %209 = vector.extract_strided_slice %190 {offsets = [0, 256], sizes = [1, 128], strides = [1, 1]} : vector<1x384xf32> to vector<1x128xf32>
    %210 = vector.extract_strided_slice %192 {offsets = [0, 256], sizes = [1, 128], strides = [1, 1]} : vector<1x384xf32> to vector<1x128xf32>
    %211 = arith.mulf %200, %210 : vector<1x128xf32>
    %212 = arith.addf %209, %211 : vector<1x128xf32>
    %213 = math.tanh %212 : vector<1x128xf32>
    %cst_53 = arith.constant 1.000000e+00 : f32
    %214 = vector.broadcast %cst_53 : f32 to vector<1x128xf32>
    %215 = arith.subf %214, %208 : vector<1x128xf32>
    %216 = arith.mulf %215, %213 : vector<1x128xf32>
    %217 = arith.mulf %208, %188 : vector<1x128xf32>
    %218 = arith.addf %216, %217 : vector<1x128xf32>
    %219 = arith.index_cast %c5_i32 : i32 to index
    %c0_54 = arith.constant 0 : index
    %220 = vector.load %arg7[%219, %c0_54] : memref<8x128xf32, #tpu.memory_space<vmem>>, vector<1x128xf32>
    tpu.vector_store %arg7[%219, %c0_54], %218 {strides = array<i32>} : memref<8x128xf32, #tpu.memory_space<vmem>>, vector<1x128xf32>,
    %221 = arith.addi %12, %c5_i32 : i32
    %c13_i32_55 = arith.constant 13 : i32
    %222 = arith.cmpi slt, %221, %c13_i32_55 : i32
    %223 = arith.select %222, %218, %188 : vector<1x128xf32>
    %c6_i32 = arith.constant 6 : i32
    %224 = arith.index_cast %c6_i32 : i32 to index
    %c0_56 = arith.constant 0 : index
    %225 = vector.load %arg9[%224, %c0_56] : memref<8x384xf32, #tpu.memory_space<vmem>>, vector<1x384xf32>
    %cst_57 = arith.constant dense<0.000000e+00> : vector<1x384xf32>
    %226 = tpu.matmul %223, %10, %cst_57 {dimension_numbers = #tpu.dot_dimension_numbers<[1], [0], [0], [1], [0, 0, 1, 1], [], []>} : vector<1x128xf32>, vector<128x384xf32>, vector<1x384xf32> -> vector<1x384xf32>
    %227 = arith.addf %226, %11 : vector<1x384xf32>
    %228 = vector.extract_strided_slice %225 {offsets = [0, 0], sizes = [1, 128], strides = [1, 1]} : vector<1x384xf32> to vector<1x128xf32>
    %229 = vector.extract_strided_slice %227 {offsets = [0, 0], sizes = [1, 128], strides = [1, 1]} : vector<1x384xf32> to vector<1x128xf32>
    %230 = arith.addf %228, %229 : vector<1x128xf32>
    %231 = arith.negf %230 : vector<1x128xf32>
    %232 = math.exp %231 : vector<1x128xf32>
    %cst_58 = arith.constant 1.000000e+00 : f32
    %233 = vector.broadcast %cst_58 : f32 to vector<1x128xf32>
    %234 = arith.addf %233, %232 : vector<1x128xf32>
    %235 = arith.divf %233, %234 : vector<1x128xf32>
    %236 = vector.extract_strided_slice %225 {offsets = [0, 128], sizes = [1, 128], strides = [1, 1]} : vector<1x384xf32> to vector<1x128xf32>
    %237 = vector.extract_strided_slice %227 {offsets = [0, 128], sizes = [1, 128], strides = [1, 1]} : vector<1x384xf32> to vector<1x128xf32>
    %238 = arith.addf %236, %237 : vector<1x128xf32>
    %239 = arith.negf %238 : vector<1x128xf32>
    %240 = math.exp %239 : vector<1x128xf32>
    %cst_59 = arith.constant 1.000000e+00 : f32
    %241 = vector.broadcast %cst_59 : f32 to vector<1x128xf32>
    %242 = arith.addf %241, %240 : vector<1x128xf32>
    %243 = arith.divf %241, %242 : vector<1x128xf32>
    %244 = vector.extract_strided_slice %225 {offsets = [0, 256], sizes = [1, 128], strides = [1, 1]} : vector<1x384xf32> to vector<1x128xf32>
    %245 = vector.extract_strided_slice %227 {offsets = [0, 256], sizes = [1, 128], strides = [1, 1]} : vector<1x384xf32> to vector<1x128xf32>
    %246 = arith.mulf %235, %245 : vector<1x128xf32>
    %247 = arith.addf %244, %246 : vector<1x128xf32>
    %248 = math.tanh %247 : vector<1x128xf32>
    %cst_60 = arith.constant 1.000000e+00 : f32
    %249 = vector.broadcast %cst_60 : f32 to vector<1x128xf32>
    %250 = arith.subf %249, %243 : vector<1x128xf32>
    %251 = arith.mulf %250, %248 : vector<1x128xf32>
    %252 = arith.mulf %243, %223 : vector<1x128xf32>
    %253 = arith.addf %251, %252 : vector<1x128xf32>
    %254 = arith.index_cast %c6_i32 : i32 to index
    %c0_61 = arith.constant 0 : index
    %255 = vector.load %arg7[%254, %c0_61] : memref<8x128xf32, #tpu.memory_space<vmem>>, vector<1x128xf32>
    tpu.vector_store %arg7[%254, %c0_61], %253 {strides = array<i32>} : memref<8x128xf32, #tpu.memory_space<vmem>>, vector<1x128xf32>,
    %256 = arith.addi %12, %c6_i32 : i32
    %c13_i32_62 = arith.constant 13 : i32
    %257 = arith.cmpi slt, %256, %c13_i32_62 : i32
    %258 = arith.select %257, %253, %223 : vector<1x128xf32>
    %c7_i32 = arith.constant 7 : i32
    %259 = arith.index_cast %c7_i32 : i32 to index
    %c0_63 = arith.constant 0 : index
    %260 = vector.load %arg9[%259, %c0_63] : memref<8x384xf32, #tpu.memory_space<vmem>>, vector<1x384xf32>
    %cst_64 = arith.constant dense<0.000000e+00> : vector<1x384xf32>
    %261 = tpu.matmul %258, %10, %cst_64 {dimension_numbers = #tpu.dot_dimension_numbers<[1], [0], [0], [1], [0, 0, 1, 1], [], []>} : vector<1x128xf32>, vector<128x384xf32>, vector<1x384xf32> -> vector<1x384xf32>
    %262 = arith.addf %261, %11 : vector<1x384xf32>
    %263 = vector.extract_strided_slice %260 {offsets = [0, 0], sizes = [1, 128], strides = [1, 1]} : vector<1x384xf32> to vector<1x128xf32>
    %264 = vector.extract_strided_slice %262 {offsets = [0, 0], sizes = [1, 128], strides = [1, 1]} : vector<1x384xf32> to vector<1x128xf32>
    %265 = arith.addf %263, %264 : vector<1x128xf32>
    %266 = arith.negf %265 : vector<1x128xf32>
    %267 = math.exp %266 : vector<1x128xf32>
    %cst_65 = arith.constant 1.000000e+00 : f32
    %268 = vector.broadcast %cst_65 : f32 to vector<1x128xf32>
    %269 = arith.addf %268, %267 : vector<1x128xf32>
    %270 = arith.divf %268, %269 : vector<1x128xf32>
    %271 = vector.extract_strided_slice %260 {offsets = [0, 128], sizes = [1, 128], strides = [1, 1]} : vector<1x384xf32> to vector<1x128xf32>
    %272 = vector.extract_strided_slice %262 {offsets = [0, 128], sizes = [1, 128], strides = [1, 1]} : vector<1x384xf32> to vector<1x128xf32>
    %273 = arith.addf %271, %272 : vector<1x128xf32>
    %274 = arith.negf %273 : vector<1x128xf32>
    %275 = math.exp %274 : vector<1x128xf32>
    %cst_66 = arith.constant 1.000000e+00 : f32
    %276 = vector.broadcast %cst_66 : f32 to vector<1x128xf32>
    %277 = arith.addf %276, %275 : vector<1x128xf32>
    %278 = arith.divf %276, %277 : vector<1x128xf32>
    %279 = vector.extract_strided_slice %260 {offsets = [0, 256], sizes = [1, 128], strides = [1, 1]} : vector<1x384xf32> to vector<1x128xf32>
    %280 = vector.extract_strided_slice %262 {offsets = [0, 256], sizes = [1, 128], strides = [1, 1]} : vector<1x384xf32> to vector<1x128xf32>
    %281 = arith.mulf %270, %280 : vector<1x128xf32>
    %282 = arith.addf %279, %281 : vector<1x128xf32>
    %283 = math.tanh %282 : vector<1x128xf32>
    %cst_67 = arith.constant 1.000000e+00 : f32
    %284 = vector.broadcast %cst_67 : f32 to vector<1x128xf32>
    %285 = arith.subf %284, %278 : vector<1x128xf32>
    %286 = arith.mulf %285, %283 : vector<1x128xf32>
    %287 = arith.mulf %278, %258 : vector<1x128xf32>
    %288 = arith.addf %286, %287 : vector<1x128xf32>
    %289 = arith.index_cast %c7_i32 : i32 to index
    %c0_68 = arith.constant 0 : index
    %290 = vector.load %arg7[%289, %c0_68] : memref<8x128xf32, #tpu.memory_space<vmem>>, vector<1x128xf32>
    tpu.vector_store %arg7[%289, %c0_68], %288 {strides = array<i32>} : memref<8x128xf32, #tpu.memory_space<vmem>>, vector<1x128xf32>,
    %291 = arith.addi %12, %c7_i32 : i32
    %c13_i32_69 = arith.constant 13 : i32
    %292 = arith.cmpi slt, %291, %c13_i32_69 : i32
    %293 = arith.select %292, %288, %258 : vector<1x128xf32>
    %c8_i32_70 = arith.constant 8 : i32
    %c0_71 = arith.constant 0 : index
    %c0_72 = arith.constant 0 : index
    %294 = vector.load %arg8[%c0_71, %c0_72] : memref<1x128xf32, #tpu.memory_space<vmem>>, vector<1x128xf32>
    tpu.vector_store %arg8[%c0_71, %c0_72], %293 {strides = array<i32>} : memref<1x128xf32, #tpu.memory_space<vmem>>, vector<1x128xf32>,
    return
  }
  func.func @transform_0(%arg0: i32) -> (i32, i32) {
    %c0_i32 = arith.constant 0 : i32
    %c0_i32_0 = arith.constant 0 : i32
    return %arg0, %c0_i32 : i32, i32
  }
  func.func @transform_1(%arg0: i32) -> (i32, i32) {
    %c0_i32 = arith.constant 0 : i32
    %c0_i32_0 = arith.constant 0 : i32
    %c0_i32_1 = arith.constant 0 : i32
    return %c0_i32, %c0_i32_0 : i32, i32
  }
  func.func @transform_2(%arg0: i32) -> (i32, i32) {
    %c0_i32 = arith.constant 0 : i32
    %c0_i32_0 = arith.constant 0 : i32
    %c0_i32_1 = arith.constant 0 : i32
    return %c0_i32, %c0_i32_0 : i32, i32
  }
  func.func @transform_3(%arg0: i32) -> (i32, i32) {
    %c0_i32 = arith.constant 0 : i32
    %c0_i32_0 = arith.constant 0 : i32
    %c0_i32_1 = arith.constant 0 : i32
    return %c0_i32, %c0_i32_0 : i32, i32
  }
  func.func @transform_4(%arg0: i32) -> (i32, i32) {
    %c0_i32 = arith.constant 0 : i32
    %c0_i32_0 = arith.constant 0 : i32
    %c0_i32_1 = arith.constant 0 : i32
    return %c0_i32, %c0_i32_0 : i32, i32
  }
  func.func @transform_5(%arg0: i32) -> (i32, i32) {
    %c0_i32 = arith.constant 0 : i32
    %c0_i32_0 = arith.constant 0 : i32
    %c0_i32_1 = arith.constant 0 : i32
    return %c0_i32, %c0_i32_0 : i32, i32
  }
  func.func @transform_6(%arg0: i32) -> (i32, i32) {
    %c0_i32 = arith.constant 0 : i32
    %c0_i32_0 = arith.constant 0 : i32
    return %arg0, %c0_i32 : i32, i32
  }
}

</mosaic_0001>

<llo_original>
// kernel: tpu_custom_call.1
$region0: #{tpu_custom_call.1}
  #allocation0 [shape = 'u32[]', space=smem, size = 0x4, offset = 0x4, fixed_abs, tag = 'smem constant byte address 0x4 - core index']
  #allocation1 [shape = 'u32[72,128]{1,0:T(1,128)}', space=vmem, size = 0x9000, scoped, tag = 'internal scratch']
  #allocation2 [shape = 'f32[1,128]{1,0:T(1,128)}', space=vmem, size = 0x200, scoped, tag = 'scratch operand']
  #allocation3 [shape = 'f32[8,384]{1,0:T(8,128)}', space=vmem, size = 0x3000, scoped, tag = 'scratch operand']
  %s0 = inlined_call_operand.hbm [shape: f32[16,128], index: 0, kind: input, shape index: {}]
  %s1 = inlined_call_operand.hbm [shape: f32[1,128], index: 1, kind: input, shape index: {}]
  %s2 = inlined_call_operand.hbm [shape: f32[128,384], index: 2, kind: input, shape index: {}]
  %s3 = inlined_call_operand.hbm [shape: f32[1,384], index: 3, kind: input, shape index: {}]
  %s4 = inlined_call_operand.hbm [shape: f32[128,384], index: 4, kind: input, shape index: {}]
  %s5 = inlined_call_operand.vmem [shape: f32[1,384], index: 5, kind: input, shape index: {}]
  %s6 = inlined_call_operand.hbm [shape: f32[16,128], index: 6, kind: output, shape index: {}]
  %s7 = sld [smem:[#allocation0]]
  $region81: #{tpu_custom_call.1} parent=0
    _
  %s9 = ssub.s32 1, %s7
  %s10 = scalar_select 0, %s9, %s7
  $region1: #{tpu_custom_call.1} parent=0
    #allocation4 [shape = 'u8[8192]{0}', space=vmem, size = 0x2000, scoped, tag = 'input window, operand 0']
    #allocation5 [shape = 's32[2]{0}', space=sflag, size = 0x8, scoped, tag = 'scoped memory for tpu_custom_call.1']
    #allocation6 [shape = 's32[2]{0}', space=sflag, size = 0x8, scoped, tag = 'scoped memory for tpu_custom_call.1']
    #allocation7 [shape = 'u8[512]{0}', space=vmem, size = 0x400, scoped, tag = 'input window, operand 1, single buffered']
    #allocation8 [shape = 's32[1]{0}', space=sflag, size = 0x4, scoped, tag = 'scoped memory for tpu_custom_call.1']
    #allocation9 [shape = 'u8[196608]{0}', space=vmem, size = 0x30000, scoped, tag = 'input window, operand 2, single buffered']
    #allocation10 [shape = 'u8[1536]{0}', space=vmem, size = 0x800, scoped, tag = 'input window, operand 3, single buffered']
    #allocation11 [shape = 's32[1]{0}', space=sflag, size = 0x4, scoped, tag = 'scoped memory for tpu_custom_call.1']
    #allocation12 [shape = 'u8[196608]{0}', space=vmem, size = 0x30000, scoped, tag = 'input window, operand 4, single buffered']
    #allocation13 [shape = 'u8[8192]{0}', space=vmem, size = 0x2000, scoped, tag = 'output window, operand 0']
    %11 = vsyncpa [#allocation5], 0
    %s12 = scalar_lea.sflag [#allocation5], 1
    %13 = vsyncpa %s12, 0
    %14 = vsyncpa [#allocation8], 0
    %15 = vsyncpa [#allocation11], 0
    %16 = vsyncpa [#allocation6], 0
    %s17 = scalar_lea.sflag [#allocation6], 1
    %18 = vsyncpa %s17, 0
    loop: start=0, step=1, limit=4
    $region2: #{tpu_custom_call.1} parent=1 // loop_pre_header
      _
    $region3: #{tpu_custom_call.1} parent=1 // loop_header
      %s20 = sphi 0, %s24
      %p21 = scmp.ge.s32.totalorder %s20, 4
      %s30 = sphi 0, %s32
      %s33 = sphi 0, %s30
      %s34 = sphi 0, %s33
      %s50 = sphi 0, %s34
      %s54 = sphi 0, %s54
      %s56 = sphi 0, %s54
      %s57 = sphi 0, %s56
      %s71 = sphi 0, %s57
      %s75 = sphi 0, %s75
      %s77 = sphi 0, %s75
      %s78 = sphi 0, %s77
      %s92 = sphi 0, %s78
      %s96 = sphi 0, %s96
      %s98 = sphi 0, %s96
      %s99 = sphi 0, %s98
      %s113 = sphi 0, %s99
      %s117 = sphi 0, %s117
      %s119 = sphi 0, %s117
      %s120 = sphi 0, %s119
      %s134 = sphi 0, %s120
      %s138 = sphi 0, %s138
      %s140 = sphi 0, %s138
      %s141 = sphi 0, %s140
      %s155 = sphi 0, %s141
      %s161 = sphi 0, %s163
      %s164 = sphi 0, %s161
      %s165 = sphi 0, %s164
      %s181 = sphi 0, %s165
    $region4: #{tpu_custom_call.1} parent=1 // loop_header_branch
      %23 = sbr.rel (%p21) target = $region8
    $region5: #{tpu_custom_call.1} parent=1 // loop_body
      %s25 = ssub.s32 %s20, 1
      %s26 = ssub.s32 %s20, 2
      %s27 = sadd.s32 %s20, 1
      %s28 = ssub.s32 %s20, %s27
      %p29 = scmp.eq.s32.totalorder %s28, 0
      %s31 = sadd.s32 %s30, 1
      %s32 = scalar_select %p29, %s30, %s31
      %p35 = pneg %p29
      %p36 = scmp.eq.s32.totalorder %s20, 1
      %p37 = por %p35, %p36
      %p38 = scmp.ne.s32.totalorder %s30, %s33
      %p39 = scmp.eq.s32.totalorder %s20, 0
      %p40 = por %p38, %p39
      %p41 = scmp.ne.s32.totalorder %s30, %s33
      %p42 = scmp.eq.s32.totalorder %s25, 1
      %p43 = por %p41, %p42
      %p44 = scmp.ne.s32.totalorder %s33, %s34
      %p45 = scmp.eq.s32.totalorder %s25, 0
      %p46 = por %p44, %p45
      %p47 = scmp.ne.s32.totalorder %s33, %s34
      %p48 = scmp.eq.s32.totalorder %s26, 1
      %p49 = por %p47, %p48
      %p51 = scmp.ne.s32.totalorder %s34, %s50
      %p52 = scmp.eq.s32.totalorder %s26, 0
      %p53 = por %p51, %p52
      %s55 = sadd.s32 %s54, 1
      %p58 = scmp.eq.s32.totalorder %s20, 1
      %p59 = scmp.ne.s32.totalorder %s54, %s56
      %p60 = scmp.eq.s32.totalorder %s20, 0
      %p61 = por %p59, %p60
      %p62 = scmp.ne.s32.totalorder %s54, %s56
      %p63 = scmp.eq.s32.totalorder %s25, 1
      %p64 = por %p62, %p63
      %p65 = scmp.ne.s32.totalorder %s56, %s57
      %p66 = scmp.eq.s32.totalorder %s25, 0
      %p67 = por %p65, %p66
      %p68 = scmp.ne.s32.totalorder %s56, %s57
      %p69 = scmp.eq.s32.totalorder %s26, 1
      %p70 = por %p68, %p69
      %p72 = scmp.ne.s32.totalorder %s57, %s71
      %p73 = scmp.eq.s32.totalorder %s26, 0
      %p74 = por %p72, %p73
      %s76 = sadd.s32 %s75, 1
      %p79 = scmp.eq.s32.totalorder %s20, 1
      %p80 = scmp.ne.s32.totalorder %s75, %s77
      %p81 = scmp.eq.s32.totalorder %s20, 0
      %p82 = por %p80, %p81
      %p83 = scmp.ne.s32.totalorder %s75, %s77
      %p84 = scmp.eq.s32.totalorder %s25, 1
      %p85 = por %p83, %p84
      %p86 = scmp.ne.s32.totalorder %s77, %s78
      %p87 = scmp.eq.s32.totalorder %s25, 0
      %p88 = por %p86, %p87
      %p89 = scmp.ne.s32.totalorder %s77, %s78
      %p90 = scmp.eq.s32.totalorder %s26, 1
      %p91 = por %p89, %p90
      %p93 = scmp.ne.s32.totalorder %s78, %s92
      %p94 = scmp.eq.s32.totalorder %s26, 0
      %p95 = por %p93, %p94
      %s97 = sadd.s32 %s96, 1
      %p100 = scmp.eq.s32.totalorder %s20, 1
      %p101 = scmp.ne.s32.totalorder %s96, %s98
      %p102 = scmp.eq.s32.totalorder %s20, 0
      %p103 = por %p101, %p102
      %p104 = scmp.ne.s32.totalorder %s96, %s98
      %p105 = scmp.eq.s32.totalorder %s25, 1
      %p106 = por %p104, %p105
      %p107 = scmp.ne.s32.totalorder %s98, %s99
      %p108 = scmp.eq.s32.totalorder %s25, 0
      %p109 = por %p107, %p108
      %p110 = scmp.ne.s32.totalorder %s98, %s99
      %p111 = scmp.eq.s32.totalorder %s26, 1
      %p112 = por %p110, %p111
      %p114 = scmp.ne.s32.totalorder %s99, %s113
      %p115 = scmp.eq.s32.totalorder %s26, 0
      %p116 = por %p114, %p115
      %s118 = sadd.s32 %s117, 1
      %p121 = scmp.eq.s32.totalorder %s20, 1
      %p122 = scmp.ne.s32.totalorder %s117, %s119
      %p123 = scmp.eq.s32.totalorder %s20, 0
      %p124 = por %p122, %p123
      %p125 = scmp.ne.s32.totalorder %s117, %s119
      %p126 = scmp.eq.s32.totalorder %s25, 1
      %p127 = por %p125, %p126
      %p128 = scmp.ne.s32.totalorder %s119, %s120
      %p129 = scmp.eq.s32.totalorder %s25, 0
      %p130 = por %p128, %p129
      %p131 = scmp.ne.s32.totalorder %s119, %s120
      %p132 = scmp.eq.s32.totalorder %s26, 1
      %p133 = por %p131, %p132
      %p135 = scmp.ne.s32.totalorder %s120, %s134
      %p136 = scmp.eq.s32.totalorder %s26, 0
      %p137 = por %p135, %p136
      %s139 = sadd.s32 %s138, 1
      %p142 = scmp.eq.s32.totalorder %s20, 1
      %p143 = scmp.ne.s32.totalorder %s138, %s140
      %p144 = scmp.eq.s32.totalorder %s20, 0
      %p145 = por %p143, %p144
      %p146 = scmp.ne.s32.totalorder %s138, %s140
      %p147 = scmp.eq.s32.totalorder %s25, 1
      %p148 = por %p146, %p147
      %p149 = scmp.ne.s32.totalorder %s140, %s141
      %p150 = scmp.eq.s32.totalorder %s25, 0
      %p151 = por %p149, %p150
      %p152 = scmp.ne.s32.totalorder %s140, %s141
      %p153 = scmp.eq.s32.totalorder %s26, 1
      %p154 = por %p152, %p153
      %p156 = scmp.ne.s32.totalorder %s141, %s155
      %p157 = scmp.eq.s32.totalorder %s26, 0
      %p158 = por %p156, %p157
      %s159 = ssub.s32 %s20, %s27
      %p160 = scmp.eq.s32.totalorder %s159, 0
      %s162 = sadd.s32 %s161, 1
      %s163 = scalar_select %p160, %s161, %s162
      %p166 = pneg %p160
      %p167 = scmp.eq.s32.totalorder %s20, 1
      %p168 = por %p166, %p167
      %p169 = scmp.ne.s32.totalorder %s161, %s164
      %p170 = scmp.eq.s32.totalorder %s20, 0
      %p171 = por %p169, %p170
      %p172 = scmp.ne.s32.totalorder %s161, %s164
      %p173 = scmp.eq.s32.totalorder %s25, 1
      %p174 = por %p172, %p173
      %p175 = scmp.ne.s32.totalorder %s164, %s165
      %p176 = scmp.eq.s32.totalorder %s25, 0
      %p177 = por %p175, %p176
      %p178 = scmp.ne.s32.totalorder %s164, %s165
      %p179 = scmp.eq.s32.totalorder %s26, 1
      %p180 = por %p178, %p179
      %p182 = scmp.ne.s32.totalorder %s165, %s181
      %p183 = scmp.eq.s32.totalorder %s26, 0
      %p184 = por %p182, %p183
      %p185 = scmp.le.s32.totalorder 1, %s20
      %p186 = scmp.lt.s32.totalorder %s20, 3
      %p187 = pnand %p185, %p186
      %p188 = pneg %p187
      // Predicated region
      $region9: #{tpu_custom_call.1} parent=5 // pred_check
        _
      $region10: #{tpu_custom_call.1} parent=5 // pred_check_branch
        %190 = sbr.rel (%p187) target = $region12
      $region11: #{tpu_custom_call.1} parent=5 // pred_region
        %s191 = ssub.s32 %s20, 1
        // Predicated region
        $region13: #{tpu_custom_call.1} parent=11 // pred_check
          %p192 = pneg %p67
        $region14: #{tpu_custom_call.1} parent=11 // pred_check_branch
          %194 = sbr.rel (%p192) target = $region16
        $region15: #{tpu_custom_call.1} parent=11 // pred_region
          %196 = vsyncadd [#allocation8], 0
          %s198 = sshll.u32 %s1, 4
          %s199 = int_to_ptr.hbm [resolvable:$true] %s198
          %s200 = sshll.u32 [#allocation7], 4
          %s201 = int_to_ptr.vmem [resolvable:$true] %s200
          %203 = dma.hbm_to_vmem [thread:$0]  %s199, 16, %s201, [#allocation8]
        $region16: #{tpu_custom_call.1} parent=11 // pred_fallthru
          _
        // Predicated region
        $region17: #{tpu_custom_call.1} parent=11 // pred_check
          %p204 = pneg %p88
        $region18: #{tpu_custom_call.1} parent=11 // pred_check_branch
          %206 = sbr.rel (%p204) target = $region20
        $region19: #{tpu_custom_call.1} parent=11 // pred_region
          %208 = vsyncadd [#allocation8], 0
          %s209 = sshll.u32 %s2, 4
          %s210 = int_to_ptr.hbm [resolvable:$true] %s209
          %s211 = sshll.u32 [#allocation9], 4
          %s212 = int_to_ptr.vmem [resolvable:$true] %s211
          %217 = dma.hbm_to_vmem [thread:$0]  %s210, 6144, %s212, [#allocation8], 384, 384, 24
        $region20: #{tpu_custom_call.1} parent=11 // pred_fallthru
          _
        // Predicated region
        $region21: #{tpu_custom_call.1} parent=11 // pred_check
          %p218 = pneg %p109
        $region22: #{tpu_custom_call.1} parent=11 // pred_check_branch
          %220 = sbr.rel (%p218) target = $region24
        $region23: #{tpu_custom_call.1} parent=11 // pred_region
          %222 = vsyncadd [#allocation11], 0
          %s224 = sshll.u32 %s3, 4
          %s225 = int_to_ptr.hbm [resolvable:$true] %s224
          %s226 = sshll.u32 [#allocation10], 4
          %s227 = int_to_ptr.vmem [resolvable:$true] %s226
          %229 = dma.hbm_to_vmem [thread:$0]  %s225, 48, %s227, [#allocation11]
        $region24: #{tpu_custom_call.1} parent=11 // pred_fallthru
          _
        // Predicated region
        $region25: #{tpu_custom_call.1} parent=11 // pred_check
          %p230 = pneg %p130
        $region26: #{tpu_custom_call.1} parent=11 // pred_check_branch
          %232 = sbr.rel (%p230) target = $region28
        $region27: #{tpu_custom_call.1} parent=11 // pred_region
          %234 = vsyncadd [#allocation11], 0
          %s235 = sshll.u32 %s4, 4
          %s236 = int_to_ptr.hbm [resolvable:$true] %s235
          %s237 = sshll.u32 [#allocation12], 4
          %s238 = int_to_ptr.vmem [resolvable:$true] %s237
          %243 = dma.hbm_to_vmem [thread:$0]  %s236, 6144, %s238, [#allocation11], 384, 384, 24
        $region28: #{tpu_custom_call.1} parent=11 // pred_fallthru
          _
        // Predicated region
        $region29: #{tpu_custom_call.1} parent=11 // pred_check
          %p244 = pneg %p151
        $region30: #{tpu_custom_call.1} parent=11 // pred_check_branch
          %246 = sbr.rel (%p244) target = $region32
        $region31: #{tpu_custom_call.1} parent=11 // pred_region
          _
        $region32: #{tpu_custom_call.1} parent=11 // pred_fallthru
          _
      $region12: #{tpu_custom_call.1} parent=5 // pred_fallthru
        _
      %p247 = scmp.lt.s32.totalorder %s20, 2
      // Predicated region
      $region33: #{tpu_custom_call.1} parent=5 // pred_check
        %p248 = pneg %p247
      $region34: #{tpu_custom_call.1} parent=5 // pred_check_branch
        %250 = sbr.rel (%p248) target = $region36
      $region35: #{tpu_custom_call.1} parent=5 // pred_region
        // Predicated region
        $region37: #{tpu_custom_call.1} parent=35 // pred_check
          %p251 = pneg %p40
        $region38: #{tpu_custom_call.1} parent=35 // pred_check_branch
          %253 = sbr.rel (%p251) target = $region40
        $region39: #{tpu_custom_call.1} parent=35 // pred_region
          %s254 = sand.u32 %s30, 1
          %s255 = scalar_lea.sflag [#allocation5], %s254
          %s256 = sand.u32 %s30, 1
          %s257 = smul.addr %s256, 8
          %s258 = scalar_lea.vmem [#allocation4], %s257
          %260 = vsyncadd %s255, 0
          %s261 = smul.addr %s20, 8
          %s262 = scalar_lea.hbm %s0, %s261
          %s264 = sshll.u32 %s262, 4
          %s265 = int_to_ptr.hbm [resolvable:$true] %s264
          %s266 = sshll.u32 %s258, 4
          %s267 = int_to_ptr.vmem [resolvable:$true] %s266
          %269 = dma.hbm_to_vmem [thread:$0]  %s265, 128, %s267, %s255
        $region40: #{tpu_custom_call.1} parent=35 // pred_fallthru
          _
      $region36: #{tpu_custom_call.1} parent=5 // pred_fallthru
        _
      %p270 = scmp.le.s32.totalorder 1, %s20
      %p271 = scmp.lt.s32.totalorder %s20, 3
      %p272 = pnand %p270, %p271
      %p273 = pneg %p272
      // Predicated region
      $region41: #{tpu_custom_call.1} parent=5 // pred_check
        _
      $region42: #{tpu_custom_call.1} parent=5 // pred_check_branch
        %275 = sbr.rel (%p272) target = $region44
      $region43: #{tpu_custom_call.1} parent=5 // pred_region
        %s276 = ssub.s32 %s20, 1
        %s277 = sand.u32 %s33, 1
        %s278 = scalar_lea.sflag [#allocation5], %s277
        %s279 = sand.u32 %s33, 1
        %s280 = smul.addr %s279, 8
        %s281 = scalar_lea.vmem [#allocation4], %s280
        // Predicated region
        $region45: #{tpu_custom_call.1} parent=43 // pred_check
          %p282 = pneg %p46
        $region46: #{tpu_custom_call.1} parent=43 // pred_check_branch
          %284 = sbr.rel (%p282) target = $region48
        $region47: #{tpu_custom_call.1} parent=43 // pred_region
          %286 = dma.done %s278, 128
        $region48: #{tpu_custom_call.1} parent=43 // pred_fallthru
          _
        // Predicated region
        $region49: #{tpu_custom_call.1} parent=43 // pred_check
          %p287 = pneg %p67
        $region50: #{tpu_custom_call.1} parent=43 // pred_check_branch
          %289 = sbr.rel (%p287) target = $region52
        $region51: #{tpu_custom_call.1} parent=43 // pred_region
          %291 = dma.done [#allocation8], 16
        $region52: #{tpu_custom_call.1} parent=43 // pred_fallthru
          _
        // Predicated region
        $region53: #{tpu_custom_call.1} parent=43 // pred_check
          %p292 = pneg %p88
        $region54: #{tpu_custom_call.1} parent=43 // pred_check_branch
          %294 = sbr.rel (%p292) target = $region56
        $region55: #{tpu_custom_call.1} parent=43 // pred_region
          %296 = dma.done [#allocation8], 6144
        $region56: #{tpu_custom_call.1} parent=43 // pred_fallthru
          _
        // Predicated region
        $region57: #{tpu_custom_call.1} parent=43 // pred_check
          %p297 = pneg %p109
        $region58: #{tpu_custom_call.1} parent=43 // pred_check_branch
          %299 = sbr.rel (%p297) target = $region60
        $region59: #{tpu_custom_call.1} parent=43 // pred_region
          %301 = dma.done [#allocation11], 48
        $region60: #{tpu_custom_call.1} parent=43 // pred_fallthru
          _
        // Predicated region
        $region61: #{tpu_custom_call.1} parent=43 // pred_check
          %p302 = pneg %p130
        $region62: #{tpu_custom_call.1} parent=43 // pred_check_branch
          %304 = sbr.rel (%p302) target = $region64
        $region63: #{tpu_custom_call.1} parent=43 // pred_region
          %306 = dma.done [#allocation11], 6144
        $region64: #{tpu_custom_call.1} parent=43 // pred_fallthru
          _
        %s307 = sand.u32 %s33, 1
        %s308 = scalar_lea.sflag [#allocation5], %s307
        %s309 = sand.u32 %s33, 1
        %s310 = smul.addr %s309, 8
        %s311 = scalar_lea.vmem [#allocation4], %s310
        %p312 = pneg %p46
        %p313 = pneg %p43
        %p314 = pneg %p67
        %p315 = pneg %p64
        %p316 = pneg %p88
        %p317 = pneg %p85
        %p318 = pneg %p109
        %p319 = pneg %p106
        %p320 = pneg %p130
        %p321 = pneg %p127
        %p322 = pneg %p151
        %p323 = pneg %p148
        %p324 = pneg %p177
        %p325 = pneg %p174
        %s326 = sand.u32 %s164, 1
        %s327 = scalar_lea.sflag [#allocation6], %s326
        %s328 = sand.u32 %s164, 1
        %s329 = smul.addr %s328, 8
        %s330 = scalar_lea.vmem [#allocation13], %s329
        %p331 = scmp.eq.s32.totalorder %s25, 0
        // Predicated region
        $region65: #{tpu_custom_call.1} parent=43 // pred_check
          %p332 = pneg %p331
        $region66: #{tpu_custom_call.1} parent=43 // pred_check_branch
          %334 = sbr.rel (%p332) target = $region68
        $region67: #{tpu_custom_call.1} parent=43 // pred_region
          %v335 = vld [vmem:[#allocation7] sm:$0x1]
          %336 = vst [vmem:[#allocation2] sm:$0x1] %v335
        $region68: #{tpu_custom_call.1} parent=43 // pred_fallthru
          _
        %v337 = vld [vmem:[%s281] sm:$0xff]
        %v338 = vld [vmem:[#allocation9] sm:$0xff]
        %v339 = vld [vmem:[#allocation9 + $0x8] sm:$0xff]
        %v340 = vld [vmem:[#allocation9 + $0x10] sm:$0xff]
        %v341 = vld [vmem:[#allocation9 + $0x18] sm:$0xff]
        %v342 = vld [vmem:[#allocation9 + $0x20] sm:$0xff]
        %v343 = vld [vmem:[#allocation9 + $0x28] sm:$0xff]
        %v344 = vld [vmem:[#allocation9 + $0x30] sm:$0xff]
        %v345 = vld [vmem:[#allocation9 + $0x38] sm:$0xff]
        %v346 = vld [vmem:[#allocation9 + $0x40] sm:$0xff]
        %v347 = vld [vmem:[#allocation9 + $0x48] sm:$0xff]
        %v348 = vld [vmem:[#allocation9 + $0x50] sm:$0xff]
        %v349 = vld [vmem:[#allocation9 + $0x58] sm:$0xff]
        %v350 = vld [vmem:[#allocation9 + $0x60] sm:$0xff]
        %v351 = vld [vmem:[#allocation9 + $0x68] sm:$0xff]
        %v352 = vld [vmem:[#allocation9 + $0x70] sm:$0xff]
        %v353 = vld [vmem:[#allocation9 + $0x78] sm:$0xff]
        %v354 = vld [vmem:[#allocation9 + $0x80] sm:$0xff]
        %v355 = vld [vmem:[#allocation9 + $0x88] sm:$0xff]
        %v356 = vld [vmem:[#allocation9 + $0x90] sm:$0xff]
        %v357 = vld [vmem:[#allocation9 + $0x98] sm:$0xff]
        %v358 = vld [vmem:[#allocation9 + $0xa0] sm:$0xff]
        %v359 = vld [vmem:[#allocation9 + $0xa8] sm:$0xff]
        %v360 = vld [vmem:[#allocation9 + $0xb0] sm:$0xff]
        %v361 = vld [vmem:[#allocation9 + $0xb8] sm:$0xff]
        %v362 = vld [vmem:[#allocation9 + $0xc0] sm:$0xff]
        %v363 = vld [vmem:[#allocation9 + $0xc8] sm:$0xff]
        %v364 = vld [vmem:[#allocation9 + $0xd0] sm:$0xff]
        %v365 = vld [vmem:[#allocation9 + $0xd8] sm:$0xff]
        %v366 = vld [vmem:[#allocation9 + $0xe0] sm:$0xff]
        %v367 = vld [vmem:[#allocation9 + $0xe8] sm:$0xff]
        %v368 = vld [vmem:[#allocation9 + $0xf0] sm:$0xff]
        %v369 = vld [vmem:[#allocation9 + $0xf8] sm:$0xff]
        %v370 = vld [vmem:[#allocation9 + $0x100] sm:$0xff]
        %v371 = vld [vmem:[#allocation9 + $0x108] sm:$0xff]
        %v372 = vld [vmem:[#allocation9 + $0x110] sm:$0xff]
        %v373 = vld [vmem:[#allocation9 + $0x118] sm:$0xff]
        %v374 = vld [vmem:[#allocation9 + $0x120] sm:$0xff]
        %v375 = vld [vmem:[#allocation9 + $0x128] sm:$0xff]
        %v376 = vld [vmem:[#allocation9 + $0x130] sm:$0xff]
        %v377 = vld [vmem:[#allocation9 + $0x138] sm:$0xff]
        %v378 = vld [vmem:[#allocation9 + $0x140] sm:$0xff]
        %v379 = vld [vmem:[#allocation9 + $0x148] sm:$0xff]
        %v380 = vld [vmem:[#allocation9 + $0x150] sm:$0xff]
        %v381 = vld [vmem:[#allocation9 + $0x158] sm:$0xff]
        %v382 = vld [vmem:[#allocation9 + $0x160] sm:$0xff]
        %v383 = vld [vmem:[#allocation9 + $0x168] sm:$0xff]
        %v384 = vld [vmem:[#allocation9 + $0x170] sm:$0xff]
        %v385 = vld [vmem:[#allocation9 + $0x178] sm:$0xff]
        %v386 = vld [vmem:[#allocation10] sm:$0x7]
        %v388 = vperm.slane %v386, 0
        %v389 = vperm.slane %v386, 1
        %v390 = vperm.slane %v386, 2
        %394 = vmatpush.msra.mxu0 %v383
        %395 = vmatpush.msra.mxu0 %v380
        %396 = vmatpush.msra.mxu0 %v377
        %397 = vmatpush.msra.mxu0 %v374
        %398 = vmatpush.msra.mxu0 %v371
        %399 = vmatpush.msra.mxu0 %v368
        %400 = vmatpush.msra.mxu0 %v365
        %401 = vmatpush.msra.mxu0 %v362
        %402 = vmatpush.msra.mxu0 %v359
        %403 = vmatpush.msra.mxu0 %v356
        %404 = vmatpush.msra.mxu0 %v353
        %405 = vmatpush.msra.mxu0 %v350
        %406 = vmatpush.msra.mxu0 %v347
        %407 = vmatpush.msra.mxu0 %v344
        %408 = vmatpush.msra.mxu0 %v341
        %409 = vmatpush.msra.mxu0 %v338
        %410 = vmatmul.f32.gmra.mxu0 %v337
        %v411 = vpop.f32.mrf.mxu0
        %v412 = vadd.f32 %v388, %v411
        %413 = vdwg.mxu0
        %414 = vmatpush.msra.mxu0 %v384
        %415 = vmatpush.msra.mxu0 %v381
        %416 = vmatpush.msra.mxu0 %v378
        %417 = vmatpush.msra.mxu0 %v375
        %418 = vmatpush.msra.mxu0 %v372
        %419 = vmatpush.msra.mxu0 %v369
        %420 = vmatpush.msra.mxu0 %v366
        %421 = vmatpush.msra.mxu0 %v363
        %422 = vmatpush.msra.mxu0 %v360
        %423 = vmatpush.msra.mxu0 %v357
        %424 = vmatpush.msra.mxu0 %v354
        %425 = vmatpush.msra.mxu0 %v351
        %426 = vmatpush.msra.mxu0 %v348
        %427 = vmatpush.msra.mxu0 %v345
        %428 = vmatpush.msra.mxu0 %v342
        %429 = vmatpush.msra.mxu0 %v339
        %430 = vmatmul.f32.gmra.mxu0 %v337
        %v431 = vpop.f32.mrf.mxu0
        %v432 = vadd.f32 %v389, %v431
        %433 = vdwg.mxu0
        %434 = vmatpush.msra.mxu0 %v385
        %435 = vmatpush.msra.mxu0 %v382
        %436 = vmatpush.msra.mxu0 %v379
        %437 = vmatpush.msra.mxu0 %v376
        %438 = vmatpush.msra.mxu0 %v373
        %439 = vmatpush.msra.mxu0 %v370
        %440 = vmatpush.msra.mxu0 %v367
        %441 = vmatpush.msra.mxu0 %v364
        %442 = vmatpush.msra.mxu0 %v361
        %443 = vmatpush.msra.mxu0 %v358
        %444 = vmatpush.msra.mxu0 %v355
        %445 = vmatpush.msra.mxu0 %v352
        %446 = vmatpush.msra.mxu0 %v349
        %447 = vmatpush.msra.mxu0 %v346
        %448 = vmatpush.msra.mxu0 %v343
        %449 = vmatpush.msra.mxu0 %v340
        %450 = vmatmul.f32.gmra.mxu0 %v337
        %v451 = vpop.f32.mrf.mxu0
        %v452 = vadd.f32 %v390, %v451
        %453 = vdwg.mxu0
        %454 = vst [vmem:[#allocation3] sm:$0xff] %v412
        %455 = vst [vmem:[#allocation3 + $0x8] sm:$0xff] %v432
        %456 = vst [vmem:[#allocation3 + $0x10] sm:$0xff] %v452
        %v457 = vld [vmem:[#allocation12] sm:$0xff]
        %v458 = vld [vmem:[#allocation12 + $0x8] sm:$0xff]
        %v459 = vld [vmem:[#allocation12 + $0x10] sm:$0xff]
        %v460 = vld [vmem:[#allocation12 + $0x18] sm:$0xff]
        %v461 = vld [vmem:[#allocation12 + $0x20] sm:$0xff]
        %v462 = vld [vmem:[#allocation12 + $0x28] sm:$0xff]
        %v463 = vld [vmem:[#allocation12 + $0x30] sm:$0xff]
        %v464 = vld [vmem:[#allocation12 + $0x38] sm:$0xff]
        %v465 = vld [vmem:[#allocation12 + $0x40] sm:$0xff]
        %v466 = vld [vmem:[#allocation12 + $0x48] sm:$0xff]
        %v467 = vld [vmem:[#allocation12 + $0x50] sm:$0xff]
        %v468 = vld [vmem:[#allocation12 + $0x58] sm:$0xff]
        %v469 = vld [vmem:[#allocation12 + $0x60] sm:$0xff]
        %v470 = vld [vmem:[#allocation12 + $0x68] sm:$0xff]
        %v471 = vld [vmem:[#allocation12 + $0x70] sm:$0xff]
        %v472 = vld [vmem:[#allocation12 + $0x78] sm:$0xff]
        %v473 = vld [vmem:[#allocation12 + $0x80] sm:$0xff]
        %v474 = vld [vmem:[#allocation12 + $0x88] sm:$0xff]
        %v475 = vld [vmem:[#allocation12 + $0x90] sm:$0xff]
        %v476 = vld [vmem:[#allocation12 + $0x98] sm:$0xff]
        %v477 = vld [vmem:[#allocation12 + $0xa0] sm:$0xff]
        %v478 = vld [vmem:[#allocation12 + $0xa8] sm:$0xff]
        %v479 = vld [vmem:[#allocation12 + $0xb0] sm:$0xff]
        %v480 = vld [vmem:[#allocation12 + $0xb8] sm:$0xff]
        %v481 = vld [vmem:[#allocation12 + $0xc0] sm:$0xff]
        %v482 = vld [vmem:[#allocation12 + $0xc8] sm:$0xff]
        %v483 = vld [vmem:[#allocation12 + $0xd0] sm:$0xff]
        %v484 = vld [vmem:[#allocation12 + $0xd8] sm:$0xff]
        %v485 = vld [vmem:[#allocation12 + $0xe0] sm:$0xff]
        %v486 = vld [vmem:[#allocation12 + $0xe8] sm:$0xff]
        %v487 = vld [vmem:[#allocation12 + $0xf0] sm:$0xff]
        %v488 = vld [vmem:[#allocation12 + $0xf8] sm:$0xff]
        %v489 = vld [vmem:[#allocation12 + $0x100] sm:$0xff]
        %v490 = vld [vmem:[#allocation12 + $0x108] sm:$0xff]
        %v491 = vld [vmem:[#allocation12 + $0x110] sm:$0xff]
        %v492 = vld [vmem:[#allocation12 + $0x118] sm:$0xff]
        %v493 = vld [vmem:[#allocation12 + $0x120] sm:$0xff]
        %v494 = vld [vmem:[#allocation12 + $0x128] sm:$0xff]
        %v495 = vld [vmem:[#allocation12 + $0x130] sm:$0xff]
        %v496 = vld [vmem:[#allocation12 + $0x138] sm:$0xff]
        %v497 = vld [vmem:[#allocation12 + $0x140] sm:$0xff]
        %v498 = vld [vmem:[#allocation12 + $0x148] sm:$0xff]
        %v499 = vld [vmem:[#allocation12 + $0x150] sm:$0xff]
        %v500 = vld [vmem:[#allocation12 + $0x158] sm:$0xff]
        %v501 = vld [vmem:[#allocation12 + $0x160] sm:$0xff]
        %v502 = vld [vmem:[#allocation12 + $0x168] sm:$0xff]
        %v503 = vld [vmem:[#allocation12 + $0x170] sm:$0xff]
        %v504 = vld [vmem:[#allocation12 + $0x178] sm:$0xff]
        %v505 = vld [vmem:[%s5] sm:$0x7]
        %s506 = smul.u32 %s25, 8
        %v507 = vld [vmem:[#allocation2] sm:$0x1]
        %v508 = vld [vmem:[#allocation3] ss:$8 sm:$0x7]
        %v510 = vperm.slane %v505, 0
        %v511 = vperm.slane %v505, 1
        %v512 = vperm.slane %v505, 2
        %516 = vmatpush.msra.mxu0 %v502
        %517 = vmatpush.msra.mxu0 %v499
        %518 = vmatpush.msra.mxu0 %v496
        %519 = vmatpush.msra.mxu0 %v493
        %520 = vmatpush.msra.mxu0 %v490
        %521 = vmatpush.msra.mxu0 %v487
        %522 = vmatpush.msra.mxu0 %v484
        %523 = vmatpush.msra.mxu0 %v481
        %524 = vmatpush.msra.mxu0 %v478
        %525 = vmatpush.msra.mxu0 %v475
        %526 = vmatpush.msra.mxu0 %v472
        %527 = vmatpush.msra.mxu0 %v469
        %528 = vmatpush.msra.mxu0 %v466
        %529 = vmatpush.msra.mxu0 %v463
        %530 = vmatpush.msra.mxu0 %v460
        %531 = vmatpush.msra.mxu0 %v457
        %532 = vmatmul.f32.gmra.mxu0 %v507
        %v533 = vpop.f32.mrf.mxu0
        %v534 = vadd.f32 %v510, %v533
        %535 = vdwg.mxu0
        %536 = vmatpush.msra.mxu0 %v503
        %537 = vmatpush.msra.mxu0 %v500
        %538 = vmatpush.msra.mxu0 %v497
        %539 = vmatpush.msra.mxu0 %v494
        %540 = vmatpush.msra.mxu0 %v491
        %541 = vmatpush.msra.mxu0 %v488
        %542 = vmatpush.msra.mxu0 %v485
        %543 = vmatpush.msra.mxu0 %v482
        %544 = vmatpush.msra.mxu0 %v479
        %545 = vmatpush.msra.mxu0 %v476
        %546 = vmatpush.msra.mxu0 %v473
        %547 = vmatpush.msra.mxu0 %v470
        %548 = vmatpush.msra.mxu0 %v467
        %549 = vmatpush.msra.mxu0 %v464
        %550 = vmatpush.msra.mxu0 %v461
        %551 = vmatpush.msra.mxu0 %v458
        %552 = vmatmul.f32.gmra.mxu0 %v507
        %v553 = vpop.f32.mrf.mxu0
        %v554 = vadd.f32 %v511, %v553
        %555 = vdwg.mxu0
        %556 = vmatpush.msra.mxu0 %v504
        %557 = vmatpush.msra.mxu0 %v501
        %558 = vmatpush.msra.mxu0 %v498
        %559 = vmatpush.msra.mxu0 %v495
        %560 = vmatpush.msra.mxu0 %v492
        %561 = vmatpush.msra.mxu0 %v489
        %562 = vmatpush.msra.mxu0 %v486
        %563 = vmatpush.msra.mxu0 %v483
        %564 = vmatpush.msra.mxu0 %v480
        %565 = vmatpush.msra.mxu0 %v477
        %566 = vmatpush.msra.mxu0 %v474
        %567 = vmatpush.msra.mxu0 %v471
        %568 = vmatpush.msra.mxu0 %v468
        %569 = vmatpush.msra.mxu0 %v465
        %570 = vmatpush.msra.mxu0 %v462
        %571 = vmatpush.msra.mxu0 %v459
        %572 = vmatmul.f32.gmra.mxu0 %v507
        %v573 = vpop.f32.mrf.mxu0
        %v574 = vadd.f32 %v512, %v573
        %575 = vdwg.mxu0
        %v576 = vadd.f32 %v508, %v534
        %v577 = vxor.u32 %v576, 2147483648
        %v578 = vmul.f32 %v577, 1.442695
        %v579 = vpow.pop %v578
        %v580 = vadd.f32 %v579, 1.0
        %v581 = vrcp.pop %v580
        %v582 = vmul.f32 %v580, %v581
        %v583 = vsub.f32 1.0, %v582
        %v584 = vmul.f32 %v581, %v583
        %v585 = vadd.f32 %v581, %v584
        %vm586 = vweird.f32 %v580
        %vm587 = vweird.f32 %v581
        %vm588 = vmor %vm586, %vm587
        %v589 = vsel %vm588, %v581, %v585
        %v590 = vand.u32 2147483647, %v580
        %vm591 = vcmp.eq.f32.partialorder %v590, 8.507059e+37
        %v592 = vand.u32 %v580, 2147483648
        %v593 = vor.u32 1.1754944e-38, %v592
        %v594 = vsel %vm591, %v593, %v589
        %v595 = vmul.f32 1.0, %v594
        %v597 = vrot.slane %v508, 1
        %v599 = vadd.f32 %v597, %v554
        %v600 = vxor.u32 %v599, 2147483648
        %v601 = vmul.f32 %v600, 1.442695
        %v602 = vpow.pop %v601
        %v603 = vadd.f32 %v602, 1.0
        %v604 = vrcp.pop %v603
        %v605 = vmul.f32 %v603, %v604
        %v606 = vsub.f32 1.0, %v605
        %v607 = vmul.f32 %v604, %v606
        %v608 = vadd.f32 %v604, %v607
        %vm609 = vweird.f32 %v603
        %vm610 = vweird.f32 %v604
        %vm611 = vmor %vm609, %vm610
        %v612 = vsel %vm611, %v604, %v608
        %v613 = vand.u32 2147483647, %v603
        %vm614 = vcmp.eq.f32.partialorder %v613, 8.507059e+37
        %v615 = vand.u32 %v603, 2147483648
        %v616 = vor.u32 1.1754944e-38, %v615
        %v617 = vsel %vm614, %v616, %v612
        %v618 = vmul.f32 1.0, %v617
        %v619 = vmul.f32 %v595, %v574
        %v620 = vrot.slane %v508, 2
        %v622 = vadd.f32 %v620, %v619
        %v623 = vtanh.pop %v622
        %v624 = vsub.f32 1.0, %v618
        %v625 = vmul.f32 %v624, %v623
        %v626 = vmul.f32 %v618, %v507
        %v627 = vadd.f32 %v625, %v626
        %628 = vst [vmem:[%s330] sm:$0x1] %v627
        %p629 = scmp.lt.s32.totalorder %s506, 13
        %s630 = scalar_select %p629, 1, 0
        %v631 = vstv %s630
        %vm632 = vcmp.eq.s32.totalorder %v631, 1
        %v633 = vsel %vm632, %v627, %v507
        %s634 = scalar_lea.vmem [#allocation3], 1
        %v635 = vld [vmem:[%s634] ss:$8 sm:$0x7]
        %636 = vmatpush.msra.mxu0 %v502
        %637 = vmatpush.msra.mxu0 %v499
        %638 = vmatpush.msra.mxu0 %v496
        %639 = vmatpush.msra.mxu0 %v493
        %640 = vmatpush.msra.mxu0 %v490
        %641 = vmatpush.msra.mxu0 %v487
        %642 = vmatpush.msra.mxu0 %v484
        %643 = vmatpush.msra.mxu0 %v481
        %644 = vmatpush.msra.mxu0 %v478
        %645 = vmatpush.msra.mxu0 %v475
        %646 = vmatpush.msra.mxu0 %v472
        %647 = vmatpush.msra.mxu0 %v469
        %648 = vmatpush.msra.mxu0 %v466
        %649 = vmatpush.msra.mxu0 %v463
        %650 = vmatpush.msra.mxu0 %v460
        %651 = vmatpush.msra.mxu0 %v457
        %652 = vmatmul.f32.gmra.mxu0 %v633
        %v653 = vpop.f32.mrf.mxu0
        %v654 = vadd.f32 %v510, %v653
        %655 = vdwg.mxu0
        %656 = vmatpush.msra.mxu0 %v503
        %657 = vmatpush.msra.mxu0 %v500
        %658 = vmatpush.msra.mxu0 %v497
        %659 = vmatpush.msra.mxu0 %v494
        %660 = vmatpush.msra.mxu0 %v491
        %661 = vmatpush.msra.mxu0 %v488
        %662 = vmatpush.msra.mxu0 %v485
        %663 = vmatpush.msra.mxu0 %v482
        %664 = vmatpush.msra.mxu0 %v479
        %665 = vmatpush.msra.mxu0 %v476
        %666 = vmatpush.msra.mxu0 %v473
        %667 = vmatpush.msra.mxu0 %v470
        %668 = vmatpush.msra.mxu0 %v467
        %669 = vmatpush.msra.mxu0 %v464
        %670 = vmatpush.msra.mxu0 %v461
        %671 = vmatpush.msra.mxu0 %v458
        %672 = vmatmul.f32.gmra.mxu0 %v633
        %v673 = vpop.f32.mrf.mxu0
        %v674 = vadd.f32 %v511, %v673
        %675 = vdwg.mxu0
        %676 = vmatpush.msra.mxu0 %v504
        %677 = vmatpush.msra.mxu0 %v501
        %678 = vmatpush.msra.mxu0 %v498
        %679 = vmatpush.msra.mxu0 %v495
        %680 = vmatpush.msra.mxu0 %v492
        %681 = vmatpush.msra.mxu0 %v489
        %682 = vmatpush.msra.mxu0 %v486
        %683 = vmatpush.msra.mxu0 %v483
        %684 = vmatpush.msra.mxu0 %v480
        %685 = vmatpush.msra.mxu0 %v477
        %686 = vmatpush.msra.mxu0 %v474
        %687 = vmatpush.msra.mxu0 %v471
        %688 = vmatpush.msra.mxu0 %v468
        %689 = vmatpush.msra.mxu0 %v465
        %690 = vmatpush.msra.mxu0 %v462
        %691 = vmatpush.msra.mxu0 %v459
        %692 = vmatmul.f32.gmra.mxu0 %v633
        %v693 = vpop.f32.mrf.mxu0
        %v694 = vadd.f32 %v512, %v693
        %695 = vdwg.mxu0
        %v696 = vadd.f32 %v635, %v654
        %v697 = vxor.u32 %v696, 2147483648
        %v698 = vmul.f32 %v697, 1.442695
        %v699 = vpow.pop %v698
        %v700 = vadd.f32 %v699, 1.0
        %v701 = vrcp.pop %v700
        %v702 = vmul.f32 %v700, %v701
        %v703 = vsub.f32 1.0, %v702
        %v704 = vmul.f32 %v701, %v703
        %v705 = vadd.f32 %v701, %v704
        %vm706 = vweird.f32 %v700
        %vm707 = vweird.f32 %v701
        %vm708 = vmor %vm706, %vm707
        %v709 = vsel %vm708, %v701, %v705
        %v710 = vand.u32 2147483647, %v700
        %vm711 = vcmp.eq.f32.partialorder %v710, 8.507059e+37
        %v712 = vand.u32 %v700, 2147483648
        %v713 = vor.u32 1.1754944e-38, %v712
        %v714 = vsel %vm711, %v713, %v709
        %v715 = vmul.f32 1.0, %v714
        %v717 = vrot.slane %v635, 1
        %v719 = vadd.f32 %v717, %v674
        %v720 = vxor.u32 %v719, 2147483648
        %v721 = vmul.f32 %v720, 1.442695
        %v722 = vpow.pop %v721
        %v723 = vadd.f32 %v722, 1.0
        %v724 = vrcp.pop %v723
        %v725 = vmul.f32 %v723, %v724
        %v726 = vsub.f32 1.0, %v725
        %v727 = vmul.f32 %v724, %v726
        %v728 = vadd.f32 %v724, %v727
        %vm729 = vweird.f32 %v723
        %vm730 = vweird.f32 %v724
        %vm731 = vmor %vm729, %vm730
        %v732 = vsel %vm731, %v724, %v728
        %v733 = vand.u32 2147483647, %v723
        %vm734 = vcmp.eq.f32.partialorder %v733, 8.507059e+37
        %v735 = vand.u32 %v723, 2147483648
        %v736 = vor.u32 1.1754944e-38, %v735
        %v737 = vsel %vm734, %v736, %v732
        %v738 = vmul.f32 1.0, %v737
        %v739 = vmul.f32 %v715, %v694
        %v740 = vrot.slane %v635, 2
        %v742 = vadd.f32 %v740, %v739
        %v743 = vtanh.pop %v742
        %v744 = vsub.f32 1.0, %v738
        %v745 = vmul.f32 %v744, %v743
        %v746 = vmul.f32 %v738, %v633
        %v747 = vadd.f32 %v745, %v746
        %748 = vst [vmem:[%s330 + $0x1] sm:$0x1] %v747
        %s749 = sadd.s32 %s506, 1
        %p750 = scmp.lt.s32.totalorder %s749, 13
        %s751 = scalar_select %p750, 1, 0
        %v752 = vstv %s751
        %vm753 = vcmp.eq.s32.totalorder %v752, 1
        %v754 = vsel %vm753, %v747, %v633
        %s755 = scalar_lea.vmem [#allocation3], 2
        %v756 = vld [vmem:[%s755] ss:$8 sm:$0x7]
        %757 = vmatpush.msra.mxu0 %v502
        %758 = vmatpush.msra.mxu0 %v499
        %759 = vmatpush.msra.mxu0 %v496
        %760 = vmatpush.msra.mxu0 %v493
        %761 = vmatpush.msra.mxu0 %v490
        %762 = vmatpush.msra.mxu0 %v487
        %763 = vmatpush.msra.mxu0 %v484
        %764 = vmatpush.msra.mxu0 %v481
        %765 = vmatpush.msra.mxu0 %v478
        %766 = vmatpush.msra.mxu0 %v475
        %767 = vmatpush.msra.mxu0 %v472
        %768 = vmatpush.msra.mxu0 %v469
        %769 = vmatpush.msra.mxu0 %v466
        %770 = vmatpush.msra.mxu0 %v463
        %771 = vmatpush.msra.mxu0 %v460
        %772 = vmatpush.msra.mxu0 %v457
        %773 = vmatmul.f32.gmra.mxu0 %v754
        %v774 = vpop.f32.mrf.mxu0
        %v775 = vadd.f32 %v510, %v774
        %776 = vdwg.mxu0
        %777 = vmatpush.msra.mxu0 %v503
        %778 = vmatpush.msra.mxu0 %v500
        %779 = vmatpush.msra.mxu0 %v497
        %780 = vmatpush.msra.mxu0 %v494
        %781 = vmatpush.msra.mxu0 %v491
        %782 = vmatpush.msra.mxu0 %v488
        %783 = vmatpush.msra.mxu0 %v485
        %784 = vmatpush.msra.mxu0 %v482
        %785 = vmatpush.msra.mxu0 %v479
        %786 = vmatpush.msra.mxu0 %v476
        %787 = vmatpush.msra.mxu0 %v473
        %788 = vmatpush.msra.mxu0 %v470
        %789 = vmatpush.msra.mxu0 %v467
        %790 = vmatpush.msra.mxu0 %v464
        %791 = vmatpush.msra.mxu0 %v461
        %792 = vmatpush.msra.mxu0 %v458
        %793 = vmatmul.f32.gmra.mxu0 %v754
        %v794 = vpop.f32.mrf.mxu0
        %v795 = vadd.f32 %v511, %v794
        %796 = vdwg.mxu0
        %797 = vmatpush.msra.mxu0 %v504
        %798 = vmatpush.msra.mxu0 %v501
        %799 = vmatpush.msra.mxu0 %v498
        %800 = vmatpush.msra.mxu0 %v495
        %801 = vmatpush.msra.mxu0 %v492
        %802 = vmatpush.msra.mxu0 %v489
        %803 = vmatpush.msra.mxu0 %v486
        %804 = vmatpush.msra.mxu0 %v483
        %805 = vmatpush.msra.mxu0 %v480
        %806 = vmatpush.msra.mxu0 %v477
        %807 = vmatpush.msra.mxu0 %v474
        %808 = vmatpush.msra.mxu0 %v471
        %809 = vmatpush.msra.mxu0 %v468
        %810 = vmatpush.msra.mxu0 %v465
        %811 = vmatpush.msra.mxu0 %v462
        %812 = vmatpush.msra.mxu0 %v459
        %813 = vmatmul.f32.gmra.mxu0 %v754
        %v814 = vpop.f32.mrf.mxu0
        %v815 = vadd.f32 %v512, %v814
        %816 = vdwg.mxu0
        %v817 = vadd.f32 %v756, %v775
        %v818 = vxor.u32 %v817, 2147483648
        %v819 = vmul.f32 %v818, 1.442695
        %v820 = vpow.pop %v819
        %v821 = vadd.f32 %v820, 1.0
        %v822 = vrcp.pop %v821
        %v823 = vmul.f32 %v821, %v822
        %v824 = vsub.f32 1.0, %v823
        %v825 = vmul.f32 %v822, %v824
        %v826 = vadd.f32 %v822, %v825
        %vm827 = vweird.f32 %v821
        %vm828 = vweird.f32 %v822
        %vm829 = vmor %vm827, %vm828
        %v830 = vsel %vm829, %v822, %v826
        %v831 = vand.u32 2147483647, %v821
        %vm832 = vcmp.eq.f32.partialorder %v831, 8.507059e+37
        %v833 = vand.u32 %v821, 2147483648
        %v834 = vor.u32 1.1754944e-38, %v833
        %v835 = vsel %vm832, %v834, %v830
        %v836 = vmul.f32 1.0, %v835
        %v838 = vrot.slane %v756, 1
        %v840 = vadd.f32 %v838, %v795
        %v841 = vxor.u32 %v840, 2147483648
        %v842 = vmul.f32 %v841, 1.442695
        %v843 = vpow.pop %v842
        %v844 = vadd.f32 %v843, 1.0
        %v845 = vrcp.pop %v844
        %v846 = vmul.f32 %v844, %v845
        %v847 = vsub.f32 1.0, %v846
        %v848 = vmul.f32 %v845, %v847
        %v849 = vadd.f32 %v845, %v848
        %vm850 = vweird.f32 %v844
        %vm851 = vweird.f32 %v845
        %vm852 = vmor %vm850, %vm851
        %v853 = vsel %vm852, %v845, %v849
        %v854 = vand.u32 2147483647, %v844
        %vm855 = vcmp.eq.f32.partialorder %v854, 8.507059e+37
        %v856 = vand.u32 %v844, 2147483648
        %v857 = vor.u32 1.1754944e-38, %v856
        %v858 = vsel %vm855, %v857, %v853
        %v859 = vmul.f32 1.0, %v858
        %v860 = vmul.f32 %v836, %v815
        %v861 = vrot.slane %v756, 2
        %v863 = vadd.f32 %v861, %v860
        %v864 = vtanh.pop %v863
        %v865 = vsub.f32 1.0, %v859
        %v866 = vmul.f32 %v865, %v864
        %v867 = vmul.f32 %v859, %v754
        %v868 = vadd.f32 %v866, %v867
        %869 = vst [vmem:[%s330 + $0x2] sm:$0x1] %v868
        %s870 = sadd.s32 %s506, 2
        %p871 = scmp.lt.s32.totalorder %s870, 13
        %s872 = scalar_select %p871, 1, 0
        %v873 = vstv %s872
        %vm874 = vcmp.eq.s32.totalorder %v873, 1
        %v875 = vsel %vm874, %v868, %v754
        %s876 = scalar_lea.vmem [#allocation3], 3
        %v877 = vld [vmem:[%s876] ss:$8 sm:$0x7]
        %878 = vmatpush.msra.mxu0 %v502
        %879 = vmatpush.msra.mxu0 %v499
        %880 = vmatpush.msra.mxu0 %v496
        %881 = vmatpush.msra.mxu0 %v493
        %882 = vmatpush.msra.mxu0 %v490
        %883 = vmatpush.msra.mxu0 %v487
        %884 = vmatpush.msra.mxu0 %v484
        %885 = vmatpush.msra.mxu0 %v481
        %886 = vmatpush.msra.mxu0 %v478
        %887 = vmatpush.msra.mxu0 %v475
        %888 = vmatpush.msra.mxu0 %v472
        %889 = vmatpush.msra.mxu0 %v469
        %890 = vmatpush.msra.mxu0 %v466
        %891 = vmatpush.msra.mxu0 %v463
        %892 = vmatpush.msra.mxu0 %v460
        %893 = vmatpush.msra.mxu0 %v457
        %894 = vmatmul.f32.gmra.mxu0 %v875
        %v895 = vpop.f32.mrf.mxu0
        %v896 = vadd.f32 %v510, %v895
        %897 = vdwg.mxu0
        %898 = vmatpush.msra.mxu0 %v503
        %899 = vmatpush.msra.mxu0 %v500
        %900 = vmatpush.msra.mxu0 %v497
        %901 = vmatpush.msra.mxu0 %v494
        %902 = vmatpush.msra.mxu0 %v491
        %903 = vmatpush.msra.mxu0 %v488
        %904 = vmatpush.msra.mxu0 %v485
        %905 = vmatpush.msra.mxu0 %v482
        %906 = vmatpush.msra.mxu0 %v479
        %907 = vmatpush.msra.mxu0 %v476
        %908 = vmatpush.msra.mxu0 %v473
        %909 = vmatpush.msra.mxu0 %v470
        %910 = vmatpush.msra.mxu0 %v467
        %911 = vmatpush.msra.mxu0 %v464
        %912 = vmatpush.msra.mxu0 %v461
        %913 = vmatpush.msra.mxu0 %v458
        %914 = vmatmul.f32.gmra.mxu0 %v875
        %v915 = vpop.f32.mrf.mxu0
        %v916 = vadd.f32 %v511, %v915
        %917 = vdwg.mxu0
        %918 = vmatpush.msra.mxu0 %v504
        %919 = vmatpush.msra.mxu0 %v501
        %920 = vmatpush.msra.mxu0 %v498
        %921 = vmatpush.msra.mxu0 %v495
        %922 = vmatpush.msra.mxu0 %v492
        %923 = vmatpush.msra.mxu0 %v489
        %924 = vmatpush.msra.mxu0 %v486
        %925 = vmatpush.msra.mxu0 %v483
        %926 = vmatpush.msra.mxu0 %v480
        %927 = vmatpush.msra.mxu0 %v477
        %928 = vmatpush.msra.mxu0 %v474
        %929 = vmatpush.msra.mxu0 %v471
        %930 = vmatpush.msra.mxu0 %v468
        %931 = vmatpush.msra.mxu0 %v465
        %932 = vmatpush.msra.mxu0 %v462
        %933 = vmatpush.msra.mxu0 %v459
        %934 = vmatmul.f32.gmra.mxu0 %v875
        %v935 = vpop.f32.mrf.mxu0
        %v936 = vadd.f32 %v512, %v935
        %937 = vdwg.mxu0
        %v938 = vadd.f32 %v877, %v896
        %v939 = vxor.u32 %v938, 2147483648
        %v940 = vmul.f32 %v939, 1.442695
        %v941 = vpow.pop %v940
        %v942 = vadd.f32 %v941, 1.0
        %v943 = vrcp.pop %v942
        %v944 = vmul.f32 %v942, %v943
        %v945 = vsub.f32 1.0, %v944
        %v946 = vmul.f32 %v943, %v945
        %v947 = vadd.f32 %v943, %v946
        %vm948 = vweird.f32 %v942
        %vm949 = vweird.f32 %v943
        %vm950 = vmor %vm948, %vm949
        %v951 = vsel %vm950, %v943, %v947
        %v952 = vand.u32 2147483647, %v942
        %vm953 = vcmp.eq.f32.partialorder %v952, 8.507059e+37
        %v954 = vand.u32 %v942, 2147483648
        %v955 = vor.u32 1.1754944e-38, %v954
        %v956 = vsel %vm953, %v955, %v951
        %v957 = vmul.f32 1.0, %v956
        %v959 = vrot.slane %v877, 1
        %v961 = vadd.f32 %v959, %v916
        %v962 = vxor.u32 %v961, 2147483648
        %v963 = vmul.f32 %v962, 1.442695
        %v964 = vpow.pop %v963
        %v965 = vadd.f32 %v964, 1.0
        %v966 = vrcp.pop %v965
        %v967 = vmul.f32 %v965, %v966
        %v968 = vsub.f32 1.0, %v967
        %v969 = vmul.f32 %v966, %v968
        %v970 = vadd.f32 %v966, %v969
        %vm971 = vweird.f32 %v965
        %vm972 = vweird.f32 %v966
        %vm973 = vmor %vm971, %vm972
        %v974 = vsel %vm973, %v966, %v970
        %v975 = vand.u32 2147483647, %v965
        %vm976 = vcmp.eq.f32.partialorder %v975, 8.507059e+37
        %v977 = vand.u32 %v965, 2147483648
        %v978 = vor.u32 1.1754944e-38, %v977
        %v979 = vsel %vm976, %v978, %v974
        %v980 = vmul.f32 1.0, %v979
        %v981 = vmul.f32 %v957, %v936
        %v982 = vrot.slane %v877, 2
        %v984 = vadd.f32 %v982, %v981
        %v985 = vtanh.pop %v984
        %v986 = vsub.f32 1.0, %v980
        %v987 = vmul.f32 %v986, %v985
        %v988 = vmul.f32 %v980, %v875
        %v989 = vadd.f32 %v987, %v988
        %990 = vst [vmem:[%s330 + $0x3] sm:$0x1] %v989
        %s991 = sadd.s32 %s506, 3
        %p992 = scmp.lt.s32.totalorder %s991, 13
        %s993 = scalar_select %p992, 1, 0
        %v994 = vstv %s993
        %vm995 = vcmp.eq.s32.totalorder %v994, 1
        %v996 = vsel %vm995, %v989, %v875
        %s997 = scalar_lea.vmem [#allocation3], 4
        %v998 = vld [vmem:[%s997] ss:$8 sm:$0x7]
        %999 = vmatpush.msra.mxu0 %v502
        %1000 = vmatpush.msra.mxu0 %v499
        %1001 = vmatpush.msra.mxu0 %v496
        %1002 = vmatpush.msra.mxu0 %v493
        %1003 = vmatpush.msra.mxu0 %v490
        %1004 = vmatpush.msra.mxu0 %v487
        %1005 = vmatpush.msra.mxu0 %v484
        %1006 = vmatpush.msra.mxu0 %v481
        %1007 = vmatpush.msra.mxu0 %v478
        %1008 = vmatpush.msra.mxu0 %v475
        %1009 = vmatpush.msra.mxu0 %v472
        %1010 = vmatpush.msra.mxu0 %v469
        %1011 = vmatpush.msra.mxu0 %v466
        %1012 = vmatpush.msra.mxu0 %v463
        %1013 = vmatpush.msra.mxu0 %v460
        %1014 = vmatpush.msra.mxu0 %v457
        %1015 = vmatmul.f32.gmra.mxu0 %v996
        %v1016 = vpop.f32.mrf.mxu0
        %v1017 = vadd.f32 %v510, %v1016
        %1018 = vdwg.mxu0
        %1019 = vmatpush.msra.mxu0 %v503
        %1020 = vmatpush.msra.mxu0 %v500
        %1021 = vmatpush.msra.mxu0 %v497
        %1022 = vmatpush.msra.mxu0 %v494
        %1023 = vmatpush.msra.mxu0 %v491
        %1024 = vmatpush.msra.mxu0 %v488
        %1025 = vmatpush.msra.mxu0 %v485
        %1026 = vmatpush.msra.mxu0 %v482
        %1027 = vmatpush.msra.mxu0 %v479
        %1028 = vmatpush.msra.mxu0 %v476
        %1029 = vmatpush.msra.mxu0 %v473
        %1030 = vmatpush.msra.mxu0 %v470
        %1031 = vmatpush.msra.mxu0 %v467
        %1032 = vmatpush.msra.mxu0 %v464
        %1033 = vmatpush.msra.mxu0 %v461
        %1034 = vmatpush.msra.mxu0 %v458
        %1035 = vmatmul.f32.gmra.mxu0 %v996
        %v1036 = vpop.f32.mrf.mxu0
        %v1037 = vadd.f32 %v511, %v1036
        %1038 = vdwg.mxu0
        %1039 = vmatpush.msra.mxu0 %v504
        %1040 = vmatpush.msra.mxu0 %v501
        %1041 = vmatpush.msra.mxu0 %v498
        %1042 = vmatpush.msra.mxu0 %v495
        %1043 = vmatpush.msra.mxu0 %v492
        %1044 = vmatpush.msra.mxu0 %v489
        %1045 = vmatpush.msra.mxu0 %v486
        %1046 = vmatpush.msra.mxu0 %v483
        %1047 = vmatpush.msra.mxu0 %v480
        %1048 = vmatpush.msra.mxu0 %v477
        %1049 = vmatpush.msra.mxu0 %v474
        %1050 = vmatpush.msra.mxu0 %v471
        %1051 = vmatpush.msra.mxu0 %v468
        %1052 = vmatpush.msra.mxu0 %v465
        %1053 = vmatpush.msra.mxu0 %v462
        %1054 = vmatpush.msra.mxu0 %v459
        %1055 = vmatmul.f32.gmra.mxu0 %v996
        %v1056 = vpop.f32.mrf.mxu0
        %v1057 = vadd.f32 %v512, %v1056
        %1058 = vdwg.mxu0
        %v1059 = vadd.f32 %v998, %v1017
        %v1060 = vxor.u32 %v1059, 2147483648
        %v1061 = vmul.f32 %v1060, 1.442695
        %v1062 = vpow.pop %v1061
        %v1063 = vadd.f32 %v1062, 1.0
        %v1064 = vrcp.pop %v1063
        %v1065 = vmul.f32 %v1063, %v1064
        %v1066 = vsub.f32 1.0, %v1065
        %v1067 = vmul.f32 %v1064, %v1066
        %v1068 = vadd.f32 %v1064, %v1067
        %vm1069 = vweird.f32 %v1063
        %vm1070 = vweird.f32 %v1064
        %vm1071 = vmor %vm1069, %vm1070
        %v1072 = vsel %vm1071, %v1064, %v1068
        %v1073 = vand.u32 2147483647, %v1063
        %vm1074 = vcmp.eq.f32.partialorder %v1073, 8.507059e+37
        %v1075 = vand.u32 %v1063, 2147483648
        %v1076 = vor.u32 1.1754944e-38, %v1075
        %v1077 = vsel %vm1074, %v1076, %v1072
        %v1078 = vmul.f32 1.0, %v1077
        %v1080 = vrot.slane %v998, 1
        %v1082 = vadd.f32 %v1080, %v1037
        %v1083 = vxor.u32 %v1082, 2147483648
        %v1084 = vmul.f32 %v1083, 1.442695
        %v1085 = vpow.pop %v1084
        %v1086 = vadd.f32 %v1085, 1.0
        %v1087 = vrcp.pop %v1086
        %v1088 = vmul.f32 %v1086, %v1087
        %v1089 = vsub.f32 1.0, %v1088
        %v1090 = vmul.f32 %v1087, %v1089
        %v1091 = vadd.f32 %v1087, %v1090
        %vm1092 = vweird.f32 %v1086
        %vm1093 = vweird.f32 %v1087
        %vm1094 = vmor %vm1092, %vm1093
        %v1095 = vsel %vm1094, %v1087, %v1091
        %v1096 = vand.u32 2147483647, %v1086
        %vm1097 = vcmp.eq.f32.partialorder %v1096, 8.507059e+37
        %v1098 = vand.u32 %v1086, 2147483648
        %v1099 = vor.u32 1.1754944e-38, %v1098
        %v1100 = vsel %vm1097, %v1099, %v1095
        %v1101 = vmul.f32 1.0, %v1100
        %v1102 = vmul.f32 %v1078, %v1057
        %v1103 = vrot.slane %v998, 2
        %v1105 = vadd.f32 %v1103, %v1102
        %v1106 = vtanh.pop %v1105
        %v1107 = vsub.f32 1.0, %v1101
        %v1108 = vmul.f32 %v1107, %v1106
        %v1109 = vmul.f32 %v1101, %v996
        %v1110 = vadd.f32 %v1108, %v1109
        %1111 = vst [vmem:[%s330 + $0x4] sm:$0x1] %v1110
        %s1112 = sadd.s32 %s506, 4
        %p1113 = scmp.lt.s32.totalorder %s1112, 13
        %s1114 = scalar_select %p1113, 1, 0
        %v1115 = vstv %s1114
        %vm1116 = vcmp.eq.s32.totalorder %v1115, 1
        %v1117 = vsel %vm1116, %v1110, %v996
        %s1118 = scalar_lea.vmem [#allocation3], 5
        %v1119 = vld [vmem:[%s1118] ss:$8 sm:$0x7]
        %1120 = vmatpush.msra.mxu0 %v502
        %1121 = vmatpush.msra.mxu0 %v499
        %1122 = vmatpush.msra.mxu0 %v496
        %1123 = vmatpush.msra.mxu0 %v493
        %1124 = vmatpush.msra.mxu0 %v490
        %1125 = vmatpush.msra.mxu0 %v487
        %1126 = vmatpush.msra.mxu0 %v484
        %1127 = vmatpush.msra.mxu0 %v481
        %1128 = vmatpush.msra.mxu0 %v478
        %1129 = vmatpush.msra.mxu0 %v475
        %1130 = vmatpush.msra.mxu0 %v472
        %1131 = vmatpush.msra.mxu0 %v469
        %1132 = vmatpush.msra.mxu0 %v466
        %1133 = vmatpush.msra.mxu0 %v463
        %1134 = vmatpush.msra.mxu0 %v460
        %1135 = vmatpush.msra.mxu0 %v457
        %1136 = vmatmul.f32.gmra.mxu0 %v1117
        %v1137 = vpop.f32.mrf.mxu0
        %v1138 = vadd.f32 %v510, %v1137
        %1139 = vdwg.mxu0
        %1140 = vmatpush.msra.mxu0 %v503
        %1141 = vmatpush.msra.mxu0 %v500
        %1142 = vmatpush.msra.mxu0 %v497
        %1143 = vmatpush.msra.mxu0 %v494
        %1144 = vmatpush.msra.mxu0 %v491
        %1145 = vmatpush.msra.mxu0 %v488
        %1146 = vmatpush.msra.mxu0 %v485
        %1147 = vmatpush.msra.mxu0 %v482
        %1148 = vmatpush.msra.mxu0 %v479
        %1149 = vmatpush.msra.mxu0 %v476
        %1150 = vmatpush.msra.mxu0 %v473
        %1151 = vmatpush.msra.mxu0 %v470
        %1152 = vmatpush.msra.mxu0 %v467
        %1153 = vmatpush.msra.mxu0 %v464
        %1154 = vmatpush.msra.mxu0 %v461
        %1155 = vmatpush.msra.mxu0 %v458
        %1156 = vmatmul.f32.gmra.mxu0 %v1117
        %v1157 = vpop.f32.mrf.mxu0
        %v1158 = vadd.f32 %v511, %v1157
        %1159 = vdwg.mxu0
        %1160 = vmatpush.msra.mxu0 %v504
        %1161 = vmatpush.msra.mxu0 %v501
        %1162 = vmatpush.msra.mxu0 %v498
        %1163 = vmatpush.msra.mxu0 %v495
        %1164 = vmatpush.msra.mxu0 %v492
        %1165 = vmatpush.msra.mxu0 %v489
        %1166 = vmatpush.msra.mxu0 %v486
        %1167 = vmatpush.msra.mxu0 %v483
        %1168 = vmatpush.msra.mxu0 %v480
        %1169 = vmatpush.msra.mxu0 %v477
        %1170 = vmatpush.msra.mxu0 %v474
        %1171 = vmatpush.msra.mxu0 %v471
        %1172 = vmatpush.msra.mxu0 %v468
        %1173 = vmatpush.msra.mxu0 %v465
        %1174 = vmatpush.msra.mxu0 %v462
        %1175 = vmatpush.msra.mxu0 %v459
        %1176 = vmatmul.f32.gmra.mxu0 %v1117
        %v1177 = vpop.f32.mrf.mxu0
        %v1178 = vadd.f32 %v512, %v1177
        %1179 = vdwg.mxu0
        %v1180 = vadd.f32 %v1119, %v1138
        %v1181 = vxor.u32 %v1180, 2147483648
        %v1182 = vmul.f32 %v1181, 1.442695
        %v1183 = vpow.pop %v1182
        %v1184 = vadd.f32 %v1183, 1.0
        %v1185 = vrcp.pop %v1184
        %v1186 = vmul.f32 %v1184, %v1185
        %v1187 = vsub.f32 1.0, %v1186
        %v1188 = vmul.f32 %v1185, %v1187
        %v1189 = vadd.f32 %v1185, %v1188
        %vm1190 = vweird.f32 %v1184
        %vm1191 = vweird.f32 %v1185
        %vm1192 = vmor %vm1190, %vm1191
        %v1193 = vsel %vm1192, %v1185, %v1189
        %v1194 = vand.u32 2147483647, %v1184
        %vm1195 = vcmp.eq.f32.partialorder %v1194, 8.507059e+37
        %v1196 = vand.u32 %v1184, 2147483648
        %v1197 = vor.u32 1.1754944e-38, %v1196
        %v1198 = vsel %vm1195, %v1197, %v1193
        %v1199 = vmul.f32 1.0, %v1198
        %v1201 = vrot.slane %v1119, 1
        %v1203 = vadd.f32 %v1201, %v1158
        %v1204 = vxor.u32 %v1203, 2147483648
        %v1205 = vmul.f32 %v1204, 1.442695
        %v1206 = vpow.pop %v1205
        %v1207 = vadd.f32 %v1206, 1.0
        %v1208 = vrcp.pop %v1207
        %v1209 = vmul.f32 %v1207, %v1208
        %v1210 = vsub.f32 1.0, %v1209
        %v1211 = vmul.f32 %v1208, %v1210
        %v1212 = vadd.f32 %v1208, %v1211
        %vm1213 = vweird.f32 %v1207
        %vm1214 = vweird.f32 %v1208
        %vm1215 = vmor %vm1213, %vm1214
        %v1216 = vsel %vm1215, %v1208, %v1212
        %v1217 = vand.u32 2147483647, %v1207
        %vm1218 = vcmp.eq.f32.partialorder %v1217, 8.507059e+37
        %v1219 = vand.u32 %v1207, 2147483648
        %v1220 = vor.u32 1.1754944e-38, %v1219
        %v1221 = vsel %vm1218, %v1220, %v1216
        %v1222 = vmul.f32 1.0, %v1221
        %v1223 = vmul.f32 %v1199, %v1178
        %v1224 = vrot.slane %v1119, 2
        %v1226 = vadd.f32 %v1224, %v1223
        %v1227 = vtanh.pop %v1226
        %v1228 = vsub.f32 1.0, %v1222
        %v1229 = vmul.f32 %v1228, %v1227
        %v1230 = vmul.f32 %v1222, %v1117
        %v1231 = vadd.f32 %v1229, %v1230
        %1232 = vst [vmem:[%s330 + $0x5] sm:$0x1] %v1231
        %s1233 = sadd.s32 %s506, 5
        %p1234 = scmp.lt.s32.totalorder %s1233, 13
        %s1235 = scalar_select %p1234, 1, 0
        %v1236 = vstv %s1235
        %vm1237 = vcmp.eq.s32.totalorder %v1236, 1
        %v1238 = vsel %vm1237, %v1231, %v1117
        %s1239 = scalar_lea.vmem [#allocation3], 6
        %v1240 = vld [vmem:[%s1239] ss:$8 sm:$0x7]
        %1241 = vmatpush.msra.mxu0 %v502
        %1242 = vmatpush.msra.mxu0 %v499
        %1243 = vmatpush.msra.mxu0 %v496
        %1244 = vmatpush.msra.mxu0 %v493
        %1245 = vmatpush.msra.mxu0 %v490
        %1246 = vmatpush.msra.mxu0 %v487
        %1247 = vmatpush.msra.mxu0 %v484
        %1248 = vmatpush.msra.mxu0 %v481
        %1249 = vmatpush.msra.mxu0 %v478
        %1250 = vmatpush.msra.mxu0 %v475
        %1251 = vmatpush.msra.mxu0 %v472
        %1252 = vmatpush.msra.mxu0 %v469
        %1253 = vmatpush.msra.mxu0 %v466
        %1254 = vmatpush.msra.mxu0 %v463
        %1255 = vmatpush.msra.mxu0 %v460
        %1256 = vmatpush.msra.mxu0 %v457
        %1257 = vmatmul.f32.gmra.mxu0 %v1238
        %v1258 = vpop.f32.mrf.mxu0
        %v1259 = vadd.f32 %v510, %v1258
        %1260 = vdwg.mxu0
        %1261 = vmatpush.msra.mxu0 %v503
        %1262 = vmatpush.msra.mxu0 %v500
        %1263 = vmatpush.msra.mxu0 %v497
        %1264 = vmatpush.msra.mxu0 %v494
        %1265 = vmatpush.msra.mxu0 %v491
        %1266 = vmatpush.msra.mxu0 %v488
        %1267 = vmatpush.msra.mxu0 %v485
        %1268 = vmatpush.msra.mxu0 %v482
        %1269 = vmatpush.msra.mxu0 %v479
        %1270 = vmatpush.msra.mxu0 %v476
        %1271 = vmatpush.msra.mxu0 %v473
        %1272 = vmatpush.msra.mxu0 %v470
        %1273 = vmatpush.msra.mxu0 %v467
        %1274 = vmatpush.msra.mxu0 %v464
        %1275 = vmatpush.msra.mxu0 %v461
        %1276 = vmatpush.msra.mxu0 %v458
        %1277 = vmatmul.f32.gmra.mxu0 %v1238
        %v1278 = vpop.f32.mrf.mxu0
        %v1279 = vadd.f32 %v511, %v1278
        %1280 = vdwg.mxu0
        %1281 = vmatpush.msra.mxu0 %v504
        %1282 = vmatpush.msra.mxu0 %v501
        %1283 = vmatpush.msra.mxu0 %v498
        %1284 = vmatpush.msra.mxu0 %v495
        %1285 = vmatpush.msra.mxu0 %v492
        %1286 = vmatpush.msra.mxu0 %v489
        %1287 = vmatpush.msra.mxu0 %v486
        %1288 = vmatpush.msra.mxu0 %v483
        %1289 = vmatpush.msra.mxu0 %v480
        %1290 = vmatpush.msra.mxu0 %v477
        %1291 = vmatpush.msra.mxu0 %v474
        %1292 = vmatpush.msra.mxu0 %v471
        %1293 = vmatpush.msra.mxu0 %v468
        %1294 = vmatpush.msra.mxu0 %v465
        %1295 = vmatpush.msra.mxu0 %v462
        %1296 = vmatpush.msra.mxu0 %v459
        %1297 = vmatmul.f32.gmra.mxu0 %v1238
        %v1298 = vpop.f32.mrf.mxu0
        %v1299 = vadd.f32 %v512, %v1298
        %1300 = vdwg.mxu0
        %v1301 = vadd.f32 %v1240, %v1259
        %v1302 = vxor.u32 %v1301, 2147483648
        %v1303 = vmul.f32 %v1302, 1.442695
        %v1304 = vpow.pop %v1303
        %v1305 = vadd.f32 %v1304, 1.0
        %v1306 = vrcp.pop %v1305
        %v1307 = vmul.f32 %v1305, %v1306
        %v1308 = vsub.f32 1.0, %v1307
        %v1309 = vmul.f32 %v1306, %v1308
        %v1310 = vadd.f32 %v1306, %v1309
        %vm1311 = vweird.f32 %v1305
        %vm1312 = vweird.f32 %v1306
        %vm1313 = vmor %vm1311, %vm1312
        %v1314 = vsel %vm1313, %v1306, %v1310
        %v1315 = vand.u32 2147483647, %v1305
        %vm1316 = vcmp.eq.f32.partialorder %v1315, 8.507059e+37
        %v1317 = vand.u32 %v1305, 2147483648
        %v1318 = vor.u32 1.1754944e-38, %v1317
        %v1319 = vsel %vm1316, %v1318, %v1314
        %v1320 = vmul.f32 1.0, %v1319
        %v1322 = vrot.slane %v1240, 1
        %v1324 = vadd.f32 %v1322, %v1279
        %v1325 = vxor.u32 %v1324, 2147483648
        %v1326 = vmul.f32 %v1325, 1.442695
        %v1327 = vpow.pop %v1326
        %v1328 = vadd.f32 %v1327, 1.0
        %v1329 = vrcp.pop %v1328
        %v1330 = vmul.f32 %v1328, %v1329
        %v1331 = vsub.f32 1.0, %v1330
        %v1332 = vmul.f32 %v1329, %v1331
        %v1333 = vadd.f32 %v1329, %v1332
        %vm1334 = vweird.f32 %v1328
        %vm1335 = vweird.f32 %v1329
        %vm1336 = vmor %vm1334, %vm1335
        %v1337 = vsel %vm1336, %v1329, %v1333
        %v1338 = vand.u32 2147483647, %v1328
        %vm1339 = vcmp.eq.f32.partialorder %v1338, 8.507059e+37
        %v1340 = vand.u32 %v1328, 2147483648
        %v1341 = vor.u32 1.1754944e-38, %v1340
        %v1342 = vsel %vm1339, %v1341, %v1337
        %v1343 = vmul.f32 1.0, %v1342
        %v1344 = vmul.f32 %v1320, %v1299
        %v1345 = vrot.slane %v1240, 2
        %v1347 = vadd.f32 %v1345, %v1344
        %v1348 = vtanh.pop %v1347
        %v1349 = vsub.f32 1.0, %v1343
        %v1350 = vmul.f32 %v1349, %v1348
        %v1351 = vmul.f32 %v1343, %v1238
        %v1352 = vadd.f32 %v1350, %v1351
        %1353 = vst [vmem:[%s330 + $0x6] sm:$0x1] %v1352
        %s1354 = sadd.s32 %s506, 6
        %p1355 = scmp.lt.s32.totalorder %s1354, 13
        %s1356 = scalar_select %p1355, 1, 0
        %v1357 = vstv %s1356
        %vm1358 = vcmp.eq.s32.totalorder %v1357, 1
        %v1359 = vsel %vm1358, %v1352, %v1238
        %s1360 = scalar_lea.vmem [#allocation3], 7
        %v1361 = vld [vmem:[%s1360] ss:$8 sm:$0x7]
        %1362 = vmatpush.msra.mxu0 %v502
        %1363 = vmatpush.msra.mxu0 %v499
        %1364 = vmatpush.msra.mxu0 %v496
        %1365 = vmatpush.msra.mxu0 %v493
        %1366 = vmatpush.msra.mxu0 %v490
        %1367 = vmatpush.msra.mxu0 %v487
        %1368 = vmatpush.msra.mxu0 %v484
        %1369 = vmatpush.msra.mxu0 %v481
        %1370 = vmatpush.msra.mxu0 %v478
        %1371 = vmatpush.msra.mxu0 %v475
        %1372 = vmatpush.msra.mxu0 %v472
        %1373 = vmatpush.msra.mxu0 %v469
        %1374 = vmatpush.msra.mxu0 %v466
        %1375 = vmatpush.msra.mxu0 %v463
        %1376 = vmatpush.msra.mxu0 %v460
        %1377 = vmatpush.msra.mxu0 %v457
        %1378 = vmatmul.f32.gmra.mxu0 %v1359
        %v1379 = vpop.f32.mrf.mxu0
        %v1380 = vadd.f32 %v510, %v1379
        %1381 = vdwg.mxu0
        %1382 = vmatpush.msra.mxu0 %v503
        %1383 = vmatpush.msra.mxu0 %v500
        %1384 = vmatpush.msra.mxu0 %v497
        %1385 = vmatpush.msra.mxu0 %v494
        %1386 = vmatpush.msra.mxu0 %v491
        %1387 = vmatpush.msra.mxu0 %v488
        %1388 = vmatpush.msra.mxu0 %v485
        %1389 = vmatpush.msra.mxu0 %v482
        %1390 = vmatpush.msra.mxu0 %v479
        %1391 = vmatpush.msra.mxu0 %v476
        %1392 = vmatpush.msra.mxu0 %v473
        %1393 = vmatpush.msra.mxu0 %v470
        %1394 = vmatpush.msra.mxu0 %v467
        %1395 = vmatpush.msra.mxu0 %v464
        %1396 = vmatpush.msra.mxu0 %v461
        %1397 = vmatpush.msra.mxu0 %v458
        %1398 = vmatmul.f32.gmra.mxu0 %v1359
        %v1399 = vpop.f32.mrf.mxu0
        %v1400 = vadd.f32 %v511, %v1399
        %1401 = vdwg.mxu0
        %1402 = vmatpush.msra.mxu0 %v504
        %1403 = vmatpush.msra.mxu0 %v501
        %1404 = vmatpush.msra.mxu0 %v498
        %1405 = vmatpush.msra.mxu0 %v495
        %1406 = vmatpush.msra.mxu0 %v492
        %1407 = vmatpush.msra.mxu0 %v489
        %1408 = vmatpush.msra.mxu0 %v486
        %1409 = vmatpush.msra.mxu0 %v483
        %1410 = vmatpush.msra.mxu0 %v480
        %1411 = vmatpush.msra.mxu0 %v477
        %1412 = vmatpush.msra.mxu0 %v474
        %1413 = vmatpush.msra.mxu0 %v471
        %1414 = vmatpush.msra.mxu0 %v468
        %1415 = vmatpush.msra.mxu0 %v465
        %1416 = vmatpush.msra.mxu0 %v462
        %1417 = vmatpush.msra.mxu0 %v459
        %1418 = vmatmul.f32.gmra.mxu0 %v1359
        %v1419 = vpop.f32.mrf.mxu0
        %v1420 = vadd.f32 %v512, %v1419
        %1421 = vdwg.mxu0
        %v1422 = vadd.f32 %v1361, %v1380
        %v1423 = vxor.u32 %v1422, 2147483648
        %v1424 = vmul.f32 %v1423, 1.442695
        %v1425 = vpow.pop %v1424
        %v1426 = vadd.f32 %v1425, 1.0
        %v1427 = vrcp.pop %v1426
        %v1428 = vmul.f32 %v1426, %v1427
        %v1429 = vsub.f32 1.0, %v1428
        %v1430 = vmul.f32 %v1427, %v1429
        %v1431 = vadd.f32 %v1427, %v1430
        %vm1432 = vweird.f32 %v1426
        %vm1433 = vweird.f32 %v1427
        %vm1434 = vmor %vm1432, %vm1433
        %v1435 = vsel %vm1434, %v1427, %v1431
        %v1436 = vand.u32 2147483647, %v1426
        %vm1437 = vcmp.eq.f32.partialorder %v1436, 8.507059e+37
        %v1438 = vand.u32 %v1426, 2147483648
        %v1439 = vor.u32 1.1754944e-38, %v1438
        %v1440 = vsel %vm1437, %v1439, %v1435
        %v1441 = vmul.f32 1.0, %v1440
        %v1443 = vrot.slane %v1361, 1
        %v1445 = vadd.f32 %v1443, %v1400
        %v1446 = vxor.u32 %v1445, 2147483648
        %v1447 = vmul.f32 %v1446, 1.442695
        %v1448 = vpow.pop %v1447
        %v1449 = vadd.f32 %v1448, 1.0
        %v1450 = vrcp.pop %v1449
        %v1451 = vmul.f32 %v1449, %v1450
        %v1452 = vsub.f32 1.0, %v1451
        %v1453 = vmul.f32 %v1450, %v1452
        %v1454 = vadd.f32 %v1450, %v1453
        %vm1455 = vweird.f32 %v1449
        %vm1456 = vweird.f32 %v1450
        %vm1457 = vmor %vm1455, %vm1456
        %v1458 = vsel %vm1457, %v1450, %v1454
        %v1459 = vand.u32 2147483647, %v1449
        %vm1460 = vcmp.eq.f32.partialorder %v1459, 8.507059e+37
        %v1461 = vand.u32 %v1449, 2147483648
        %v1462 = vor.u32 1.1754944e-38, %v1461
        %v1463 = vsel %vm1460, %v1462, %v1458
        %v1464 = vmul.f32 1.0, %v1463
        %v1465 = vmul.f32 %v1441, %v1420
        %v1466 = vrot.slane %v1361, 2
        %v1468 = vadd.f32 %v1466, %v1465
        %v1469 = vtanh.pop %v1468
        %v1470 = vsub.f32 1.0, %v1464
        %v1471 = vmul.f32 %v1470, %v1469
        %v1472 = vmul.f32 %v1464, %v1359
        %v1473 = vadd.f32 %v1471, %v1472
        %1474 = vst [vmem:[%s330 + $0x7] sm:$0x1] %v1473
        %s1475 = sadd.s32 %s506, 7
        %p1476 = scmp.lt.s32.totalorder %s1475, 13
        %s1477 = scalar_select %p1476, 1, 0
        %v1478 = vstv %s1477
        %vm1479 = vcmp.eq.s32.totalorder %v1478, 1
        %v1480 = vsel %vm1479, %v1473, %v1359
        %1481 = vst [vmem:[#allocation2] sm:$0x1] %v1480
        %s1482 = sand.u32 %s164, 1
        %s1483 = scalar_lea.sflag [#allocation6], %s1482
        %s1484 = sand.u32 %s164, 1
        %s1485 = smul.addr %s1484, 8
        %s1486 = scalar_lea.vmem [#allocation13], %s1485
        // Predicated region
        $region69: #{tpu_custom_call.1} parent=43 // pred_check
          %p1487 = pneg %p174
        $region70: #{tpu_custom_call.1} parent=43 // pred_check_branch
          %1489 = sbr.rel (%p1487) target = $region72
        $region71: #{tpu_custom_call.1} parent=43 // pred_region
          %1491 = vsyncadd %s1483, 0
          %s1492 = smul.addr %s25, 8
          %s1493 = scalar_lea.hbm %s6, %s1492
          %s1495 = sshll.u32 %s1486, 4
          %s1496 = int_to_ptr.vmem [resolvable:$true] %s1495
          %s1497 = sshll.u32 %s1493, 4
          %s1498 = int_to_ptr.hbm [resolvable:$true] %s1497
          %1500 = dma.vmem_to_hbm [thread:$0]  %s1496, 128, %s1498, %s1483
        $region72: #{tpu_custom_call.1} parent=43 // pred_fallthru
          _
      $region44: #{tpu_custom_call.1} parent=5 // pred_fallthru
        _
      %p1501 = scmp.le.s32.totalorder 2, %s20
      // Predicated region
      $region73: #{tpu_custom_call.1} parent=5 // pred_check
        %p1502 = pneg %p1501
      $region74: #{tpu_custom_call.1} parent=5 // pred_check_branch
        %1504 = sbr.rel (%p1502) target = $region76
      $region75: #{tpu_custom_call.1} parent=5 // pred_region
        %s1505 = ssub.s32 %s20, 2
        // Predicated region
        $region77: #{tpu_custom_call.1} parent=75 // pred_check
          %p1506 = pneg %p180
        $region78: #{tpu_custom_call.1} parent=75 // pred_check_branch
          %1508 = sbr.rel (%p1506) target = $region80
        $region79: #{tpu_custom_call.1} parent=75 // pred_region
          %s1509 = sand.u32 %s165, 1
          %s1510 = scalar_lea.sflag [#allocation6], %s1509
          %s1511 = sand.u32 %s165, 1
          %s1512 = smul.addr %s1511, 8
          %s1513 = scalar_lea.vmem [#allocation13], %s1512
          %1515 = dma.done %s1510, 128
        $region80: #{tpu_custom_call.1} parent=75 // pred_fallthru
          _
      $region76: #{tpu_custom_call.1} parent=5 // pred_fallthru
        _
    $region6: #{tpu_custom_call.1} parent=1 // loop_footer
      %s24 = sadd.s32 1, %s20
    $region7: #{tpu_custom_call.1} parent=1 // loop_footer_branch
      %19 = sbr.rel target = $region3
    $region8: #{tpu_custom_call.1} parent=1 // loop_exit
      _
    %1516 = vsyncpa [#allocation5], 1
    %s1517 = scalar_lea.sflag [#allocation5], 1
    %1518 = vsyncpa %s1517, 1
    %1519 = vsyncpa [#allocation8], 1
    %1520 = vsyncpa [#allocation11], 1
    %1521 = vsyncpa [#allocation6], 1
    %s1522 = scalar_lea.sflag [#allocation6], 1
    %1523 = vsyncpa %s1522, 1

</llo_original>
